<compile_context>
chip_gen: v7x
topology: tpu7x:2x2x1
jax: 0.10.0
libtpu: 0.0.40
codegen_flags: <defaults>
</compile_context>

<pallas_src>
import math
import functools
import numpy as np
import jax
import jax.numpy as jnp
from jax import lax
from jax.experimental import pallas as pl
from jax.experimental.pallas import tpu as pltpu  # noqa: F401  (TPU backend; fits default VMEM budget)

# ---------------- model hyper-parameters ----------------
D_MODEL = 32
N_HEAD = 4          # declared by the module but unused by its forward (single-head linear attention)
NUM_LAYERS = 2
DIM_FF = 64
DROPOUT = 0.1       # identity in eval mode
SEQ = 8
BATCH = 2
LN_EPS = 1e-5


# ---------------- fused Pallas kernel: PE add + all encoder layers ----------------
def fused_encoder_kernel(x_ref, pe_ref, wqkv_ref, wo_ref, w1_ref, w2_ref, vec_ref, o_ref, *, batch):
    """All refs are whole arrays resident in VMEM (grid-less call).

    x_ref, pe_ref : (S*B, D)       flattened seq-major activations (row = s*B + b)
    wqkv_ref      : (L, D, 3D)     concatenated Q|K|V projection weights
    wo_ref        : (L, D, D)
    w1_ref        : (L, D, FF)
    w2_ref        : (L, FF, D)
    vec_ref       : (L, 8, 3D)     packed [bqkv | bo | b1 | b2 | g1 | be1 | g2 | be2] rows
    o_ref         : (S*B, D)
    """
    D = wo_ref.shape[-1]
    FF = w1_ref.shape[-1]
    n_layers = wqkv_ref.shape[0]
    n_rows = x_ref.shape[0]

    def layer_norm(z, g, b):
        # Fused moments: E[z] and E[z^2] are independent reductions (co-issuable on the XLU);
        # var = E[z^2] - mu^2 drops the dependent (z - mu) pass.  fp32 keeps this safe.
        mu = jnp.mean(z, axis=-1, keepdims=True)
        ex2 = jnp.mean(z * z, axis=-1, keepdims=True)
        var = ex2 - mu * mu
        return (z - mu) * lax.rsqrt(var + LN_EPS) * g + b

    # positional encoding (dropout = identity in eval mode)
    x = x_ref[...] + pe_ref[...]

    # per-batch row masks (row r belongs to batch r % B); hoisted out of the layer loop
    row_ids = lax.broadcasted_iota(jnp.int32, (n_rows, 1), 0)
    masks = [(row_ids % batch == b).astype(jnp.float32) for b in range(batch)]

    for l in range(n_layers):
        wqkv = wqkv_ref[l]                      # (D, 3D)
        wo = wo_ref[l]                          # (D, D)
        w1 = w1_ref[l]                          # (D, FF)
        w2 = w2_ref[l]                          # (FF, D)
        vec = vec_ref[l]                        # (8, 3D); each row below is used exactly once per
        bqkv = vec[0:1, :]                      # layer, so one implicit sublane broadcast per use
        bo = vec[1:2, 0:D]                      # is already minimal (stride-0 loads skipped).
        b1 = vec[2:3, 0:FF]
        b2 = vec[3:4, 0:D]
        g1 = vec[4:5, 0:D]
        be1 = vec[5:6, 0:D]
        g2 = vec[6:7, 0:D]
        be2 = vec[7:8, 0:D]

        # ---- linear attention: fused Q|K|V projection (one MXU push) ----
        qkv = jnp.dot(x, wqkv, preferred_element_type=jnp.float32) + bqkv   # (S*B, 3D)
        # elu(z)+1  ==  z+1 (z>0) ; exp(z) (z<=0)  — applied once to the combined q|k slab.
        qk = qkv[:, 0:2 * D]
        qk = jnp.where(qk > 0, qk + 1.0, jnp.exp(jnp.minimum(qk, 0.0)))     # (S*B, 2D)
        v = qkv[:, 2 * D:3 * D]                                             # (S*B, D)

        # ---- block-diagonal batched KV contraction (replaces the serial per-batch loop) ----
        # q_blk/k_blk: (S*B, B*D).  Rows of batch b carry their q/k only in lane-block b, so
        #   kv_all = k_blk^T @ v   -> (B*D, D)  stacks all per-batch KV matrices, and
        #   attn   = q_blk @ kv_all -> (S*B, D) applies each row's own batch KV — 2 MXU pushes total.
        q_parts, k_parts = [], []
        for b in range(batch):
            mqk = qk * masks[b]                                             # (S*B, 2D) masked slab
            q_parts.append(mqk[:, 0:D])
            k_parts.append(mqk[:, D:2 * D])
        q_blk = jnp.concatenate(q_parts, axis=1)                            # (S*B, B*D)
        k_blk = jnp.concatenate(k_parts, axis=1)                            # (S*B, B*D)

        kv_all = lax.dot_general(k_blk, v, (((0,), (0,)), ((), ())),
                                 preferred_element_type=jnp.float32)        # (B*D, D)
        attn = jnp.dot(q_blk, kv_all, preferred_element_type=jnp.float32)   # (S*B, D)
        attn = jnp.dot(attn, wo, preferred_element_type=jnp.float32) + bo

        # ---- residual + LayerNorm 1 ----
        src = layer_norm(x + attn, g1, be1)

        # ---- feed-forward (dropout layers are identity in eval mode) ----
        h = jnp.maximum(jnp.dot(src, w1, preferred_element_type=jnp.float32) + b1, 0.0)
        ff = jnp.dot(h, w2, preferred_element_type=jnp.float32) + b2

        # ---- residual + LayerNorm 2 ----
        x = layer_norm(src + ff, g2, be2)

    o_ref[...] = x.astype(o_ref.dtype)


# ---------------- forward wrapper (single grid-less pallas_call, no transposes) ----------------
@jax.jit
def transformer_encoder_forward(x_sbd, pe_flat, wqkv, wo, w1, w2, vecs):
    S, B, D = x_sbd.shape
    x_flat = x_sbd.reshape(S * B, D)          # free reshape: row = s*B + b
    kernel = functools.partial(fused_encoder_kernel, batch=B)
    out_flat = pl.pallas_call(
        kernel,
        out_shape=jax.ShapeDtypeStruct((S * B, D), jnp.float32),
    )(x_flat, pe_flat, wqkv, wo, w1, w2, vecs)
    return out_flat.reshape(S, B, D)


# ---------------- positional encoding table ----------------
def make_positional_encoding(max_len, d_model):
    position = np.arange(max_len, dtype=np.float32)[:, None]
    div_term = np.exp(np.arange(0, d_model, 2, dtype=np.float32) * (-math.log(10000.0) / d_model))
    pe = np.zeros((max_len, d_model), dtype=np.float32)
    pe[:, 0::2] = np.sin(position * div_term)
    pe[:, 1::2] = np.cos(position * div_term)
    return jnp.asarray(pe)


# ---------------- parameter init (deterministic, synthetic) ----------------
def init_layer_params(key, d_model, dim_ff):
    ks = jax.random.split(key, 6)
    scale = 1.0 / math.sqrt(d_model)
    scale_ff = 1.0 / math.sqrt(dim_ff)

    def lin(k, fan_in, fan_out, s):
        # stored pre-transposed: (in, out) so the kernel does x @ W
        w = jax.random.uniform(k, (fan_in, fan_out), jnp.float32, -s, s)
        b = jax.random.uniform(jax.random.fold_in(k, 1), (1, fan_out), jnp.float32, -s, s)
        return w, b

    wq, bq = lin(ks[0], d_model, d_model, scale)
    wk, bk = lin(ks[1], d_model, d_model, scale)
    wv, bv = lin(ks[2], d_model, d_model, scale)
    wo, bo = lin(ks[3], d_model, d_model, scale)
    w1, b1 = lin(ks[4], d_model, dim_ff, scale)
    w2, b2 = lin(ks[5], dim_ff, d_model, scale_ff)
    return dict(
        wq=wq, bq=bq, wk=wk, bk=bk, wv=wv, bv=bv, wo=wo, bo=bo,
        w1=w1, b1=b1, w2=w2, b2=b2,
        g1=jnp.ones((1, d_model), jnp.float32), be1=jnp.zeros((1, d_model), jnp.float32),
        g2=jnp.ones((1, d_model), jnp.float32), be2=jnp.zeros((1, d_model), jnp.float32),
    )


def pack_params(layer_params, d_model, dim_ff):
    """Pack per-layer weights into 5 stacked arrays (done once at setup)."""
    width = 3 * d_model                      # >= dim_ff and >= d_model
    wqkv, wo, w1, w2, vecs = [], [], [], [], []

    def pad(v):
        return jnp.pad(v, ((0, 0), (0, width - v.shape[1])))

    for p in layer_params:
        wqkv.append(jnp.concatenate([p["wq"], p["wk"], p["wv"]], axis=1))   # (D, 3D)
        wo.append(p["wo"])
        w1.append(p["w1"])
        w2.append(p["w2"])
        vecs.append(jnp.concatenate([
            pad(jnp.concatenate([p["bq"], p["bk"], p["bv"]], axis=1)),      # row 0: bqkv
            pad(p["bo"]), pad(p["b1"]), pad(p["b2"]),                       # rows 1-3
            pad(p["g1"]), pad(p["be1"]), pad(p["g2"]), pad(p["be2"]),       # rows 4-7
        ], axis=0))                                                         # (8, 3D)
    return (jnp.stack(wqkv), jnp.stack(wo), jnp.stack(w1), jnp.stack(w2), jnp.stack(vecs))


# ---------------- pure-JAX reference (mirrors the PyTorch module, eval mode) ----------------
def reference_forward(x_sbd, layer_params, pe):
    S = x_sbd.shape[0]
    x = x_sbd + pe[:S][:, None, :]            # (S, B, D); dropout = identity

    def elu1(z):
        return jnp.where(z > 0, z + 1.0, jnp.exp(z))

    def ln(z, g, b):
        mu = jnp.mean(z, axis=-1, keepdims=True)
        var = jnp.mean((z - mu) ** 2, axis=-1, keepdims=True)
        return (z - mu) / jnp.sqrt(var + LN_EPS) * g + b

    for p in layer_params:
        q = elu1(x @ p["wq"] + p["bq"])
        k = elu1(x @ p["wk"] + p["bk"])
        v = x @ p["wv"] + p["bv"]
        kv = jnp.einsum("sbd,sbe->bde", k, v)                 # K^T V per batch
        attn = jnp.einsum("sbd,bde->sbe", q, kv) @ p["wo"] + p["bo"]
        x = ln(x + attn, p["g1"], p["be1"])
        ff = jnp.maximum(x @ p["w1"] + p["b1"], 0.0) @ p["w2"] + p["b2"]
        x = ln(x + ff, p["g2"], p["be2"])
    return x


if __name__ == "__main__":
    key = jax.random.PRNGKey(0)
    x = jax.random.normal(key, (SEQ, BATCH, D_MODEL), dtype=jnp.float32)   # (seq, batch, d_model)

    pkey = jax.random.PRNGKey(42)
    layer_keys = jax.random.split(pkey, NUM_LAYERS)
    layer_params = [init_layer_params(k, D_MODEL, DIM_FF) for k in layer_keys]
    wqkv, wo, w1, w2, vecs = pack_params(layer_params, D_MODEL, DIM_FF)

    pe = make_positional_encoding(5000, D_MODEL)
    # PE rows replicated over batch so row s*B+b of the flat slab gets pe[s] (computed once)
    pe_flat = jnp.repeat(pe[:SEQ], BATCH, axis=0)                          # (S*B, D)

    out = transformer_encoder_forward(x, pe_flat, wqkv, wo, w1, w2, vecs)
    out = jax.block_until_ready(out)

    ref = jax.block_until_ready(reference_forward(x, layer_params, pe))
    assert out.shape == (SEQ, BATCH, D_MODEL)
    np.testing.assert_allclose(np.asarray(out), np.asarray(ref), rtol=1e-4, atol=1e-4)

    print("KERNEL_OK")
</pallas_src>

<mosaic_0001>
module attributes {stable_mosaic.version = 11 : i64} {
  func.func @fused_encoder_kernel(%arg0: memref<16x32xf32, #tpu.memory_space<vmem>>, %arg1: memref<16x32xf32, #tpu.memory_space<vmem>>, %arg2: memref<2x32x96xf32, #tpu.memory_space<vmem>>, %arg3: memref<2x32x32xf32, #tpu.memory_space<vmem>>, %arg4: memref<2x32x64xf32, #tpu.memory_space<vmem>>, %arg5: memref<2x64x32xf32, #tpu.memory_space<vmem>>, %arg6: memref<2x8x96xf32, #tpu.memory_space<vmem>>, %arg7: memref<16x32xf32, #tpu.memory_space<vmem>>) attributes {dimension_semantics = [], scalar_prefetch = 0 : i64, scratch_operands = 0 : i64, tpu.core_type = #tpu.core_type<tc>} {
    %c0 = arith.constant 0 : index
    %c0_0 = arith.constant 0 : index
    %0 = vector.load %arg0[%c0, %c0_0] : memref<16x32xf32, #tpu.memory_space<vmem>>, vector<16x32xf32>
    %c0_1 = arith.constant 0 : index
    %c0_2 = arith.constant 0 : index
    %1 = vector.load %arg1[%c0_1, %c0_2] : memref<16x32xf32, #tpu.memory_space<vmem>>, vector<16x32xf32>
    %2 = arith.addf %0, %1 : vector<16x32xf32>
    %3 = tpu.iota {dimensions = array<i32: 0>} : vector<16x1xi32>
    %c2_i32 = arith.constant 2 : i32
    %c0_i32 = arith.constant 0 : i32
    %4 = arith.cmpi eq, %c2_i32, %c0_i32 : i32
    %c1_i32 = arith.constant 1 : i32
    %5 = arith.select %4, %c1_i32, %c2_i32 : i32
    %6 = vector.broadcast %5 : i32 to vector<16x1xi32>
    %7 = arith.remsi %3, %6 : vector<16x1xi32>
    %c0_i32_3 = arith.constant 0 : i32
    %8 = vector.broadcast %c0_i32_3 : i32 to vector<16x1xi32>
    %9 = arith.cmpi ne, %7, %8 : vector<16x1xi32>
    %c0_i32_4 = arith.constant 0 : i32
    %10 = vector.broadcast %c0_i32_4 : i32 to vector<16x1xi32>
    %11 = arith.cmpi slt, %7, %10 : vector<16x1xi32>
    %c0_i32_5 = arith.constant 0 : i32
    %12 = arith.cmpi slt, %5, %c0_i32_5 : i32
    %13 = vector.broadcast %12 : i1 to vector<16x1xi1>
    %14 = vector.broadcast %13 : vector<16x1xi1> to vector<16x1xi1>
    %15 = arith.xori %11, %14 : vector<16x1xi1>
    %16 = arith.andi %15, %9 : vector<16x1xi1>
    %17 = vector.broadcast %5 : i32 to vector<16x1xi32>
    %18 = arith.addi %7, %17 : vector<16x1xi32>
    %19 = arith.select %16, %18, %7 : vector<16x1xi1>, vector<16x1xi32>
    %c0_i32_6 = arith.constant 0 : i32
    %20 = vector.broadcast %c0_i32_6 : i32 to vector<16x1xi32>
    %21 = arith.cmpi eq, %19, %20 : vector<16x1xi32>
    %22 = arith.extui %21 : vector<16x1xi1> to vector<16x1xi32>
    %23 = arith.sitofp %22 : vector<16x1xi32> to vector<16x1xf32>
    %c2_i32_7 = arith.constant 2 : i32
    %c0_i32_8 = arith.constant 0 : i32
    %24 = arith.cmpi eq, %c2_i32_7, %c0_i32_8 : i32
    %c1_i32_9 = arith.constant 1 : i32
    %25 = arith.select %24, %c1_i32_9, %c2_i32_7 : i32
    %26 = vector.broadcast %25 : i32 to vector<16x1xi32>
    %27 = arith.remsi %3, %26 : vector<16x1xi32>
    %c0_i32_10 = arith.constant 0 : i32
    %28 = vector.broadcast %c0_i32_10 : i32 to vector<16x1xi32>
    %29 = arith.cmpi ne, %27, %28 : vector<16x1xi32>
    %c0_i32_11 = arith.constant 0 : i32
    %30 = vector.broadcast %c0_i32_11 : i32 to vector<16x1xi32>
    %31 = arith.cmpi slt, %27, %30 : vector<16x1xi32>
    %c0_i32_12 = arith.constant 0 : i32
    %32 = arith.cmpi slt, %25, %c0_i32_12 : i32
    %33 = vector.broadcast %32 : i1 to vector<16x1xi1>
    %34 = vector.broadcast %33 : vector<16x1xi1> to vector<16x1xi1>
    %35 = arith.xori %31, %34 : vector<16x1xi1>
    %36 = arith.andi %35, %29 : vector<16x1xi1>
    %37 = vector.broadcast %25 : i32 to vector<16x1xi32>
    %38 = arith.addi %27, %37 : vector<16x1xi32>
    %39 = arith.select %36, %38, %27 : vector<16x1xi1>, vector<16x1xi32>
    %c1_i32_13 = arith.constant 1 : i32
    %40 = vector.broadcast %c1_i32_13 : i32 to vector<16x1xi32>
    %41 = arith.cmpi eq, %39, %40 : vector<16x1xi32>
    %42 = arith.extui %41 : vector<16x1xi1> to vector<16x1xi32>
    %43 = arith.sitofp %42 : vector<16x1xi32> to vector<16x1xf32>
    %c0_14 = arith.constant 0 : index
    %c0_15 = arith.constant 0 : index
    %c0_16 = arith.constant 0 : index
    %44 = vector.load %arg2[%c0_14, %c0_15, %c0_16] : memref<2x32x96xf32, #tpu.memory_space<vmem>>, vector<1x32x96xf32>
    %45 = vector.shape_cast %44 : vector<1x32x96xf32> to vector<32x96xf32>
    %c0_17 = arith.constant 0 : index
    %c0_18 = arith.constant 0 : index
    %c0_19 = arith.constant 0 : index
    %46 = vector.load %arg3[%c0_17, %c0_18, %c0_19] : memref<2x32x32xf32, #tpu.memory_space<vmem>>, vector<1x32x32xf32>
    %47 = vector.shape_cast %46 : vector<1x32x32xf32> to vector<32x32xf32>
    %c0_20 = arith.constant 0 : index
    %c0_21 = arith.constant 0 : index
    %c0_22 = arith.constant 0 : index
    %48 = vector.load %arg4[%c0_20, %c0_21, %c0_22] : memref<2x32x64xf32, #tpu.memory_space<vmem>>, vector<1x32x64xf32>
    %49 = vector.shape_cast %48 : vector<1x32x64xf32> to vector<32x64xf32>
    %c0_23 = arith.constant 0 : index
    %c0_24 = arith.constant 0 : index
    %c0_25 = arith.constant 0 : index
    %50 = vector.load %arg5[%c0_23, %c0_24, %c0_25] : memref<2x64x32xf32, #tpu.memory_space<vmem>>, vector<1x64x32xf32>
    %51 = vector.shape_cast %50 : vector<1x64x32xf32> to vector<64x32xf32>
    %c0_26 = arith.constant 0 : index
    %c0_27 = arith.constant 0 : index
    %c0_28 = arith.constant 0 : index
    %52 = vector.load %arg6[%c0_26, %c0_27, %c0_28] : memref<2x8x96xf32, #tpu.memory_space<vmem>>, vector<1x8x96xf32>
    %53 = vector.shape_cast %52 : vector<1x8x96xf32> to vector<8x96xf32>
    %54 = vector.extract_strided_slice %53 {offsets = [0, 0], sizes = [1, 96], strides = [1, 1]} : vector<8x96xf32> to vector<1x96xf32>
    %55 = vector.extract_strided_slice %53 {offsets = [1, 0], sizes = [1, 32], strides = [1, 1]} : vector<8x96xf32> to vector<1x32xf32>
    %56 = vector.extract_strided_slice %53 {offsets = [2, 0], sizes = [1, 64], strides = [1, 1]} : vector<8x96xf32> to vector<1x64xf32>
    %57 = vector.extract_strided_slice %53 {offsets = [3, 0], sizes = [1, 32], strides = [1, 1]} : vector<8x96xf32> to vector<1x32xf32>
    %58 = vector.extract_strided_slice %53 {offsets = [4, 0], sizes = [1, 32], strides = [1, 1]} : vector<8x96xf32> to vector<1x32xf32>
    %59 = vector.extract_strided_slice %53 {offsets = [5, 0], sizes = [1, 32], strides = [1, 1]} : vector<8x96xf32> to vector<1x32xf32>
    %60 = vector.extract_strided_slice %53 {offsets = [6, 0], sizes = [1, 32], strides = [1, 1]} : vector<8x96xf32> to vector<1x32xf32>
    %61 = vector.extract_strided_slice %53 {offsets = [7, 0], sizes = [1, 32], strides = [1, 1]} : vector<8x96xf32> to vector<1x32xf32>
    %cst = arith.constant dense<0.000000e+00> : vector<16x96xf32>
    %62 = tpu.matmul %2, %45, %cst {dimension_numbers = #tpu.dot_dimension_numbers<[1], [0], [0], [1], [0, 0, 1, 1], [], []>} : vector<16x32xf32>, vector<32x96xf32>, vector<16x96xf32> -> vector<16x96xf32>
    %63 = vector.broadcast %54 : vector<1x96xf32> to vector<16x96xf32>
    %64 = arith.addf %62, %63 : vector<16x96xf32>
    %65 = vector.extract_strided_slice %64 {offsets = [0, 0], sizes = [16, 64], strides = [1, 1]} : vector<16x96xf32> to vector<16x64xf32>
    %cst_29 = arith.constant 0.000000e+00 : f32
    %66 = vector.broadcast %cst_29 : f32 to vector<16x64xf32>
    %67 = arith.cmpf ogt, %65, %66 : vector<16x64xf32>
    %cst_30 = arith.constant 1.000000e+00 : f32
    %68 = vector.broadcast %cst_30 : f32 to vector<16x64xf32>
    %69 = arith.addf %65, %68 : vector<16x64xf32>
    %cst_31 = arith.constant 0.000000e+00 : f32
    %70 = vector.broadcast %cst_31 : f32 to vector<16x64xf32>
    %71 = arith.minimumf %65, %70 : vector<16x64xf32>
    %72 = math.exp %71 : vector<16x64xf32>
    %73 = arith.select %67, %69, %72 : vector<16x64xi1>, vector<16x64xf32>
    %74 = vector.extract_strided_slice %64 {offsets = [0, 64], sizes = [16, 32], strides = [1, 1]} : vector<16x96xf32> to vector<16x32xf32>
    %75 = vector.broadcast %23 : vector<16x1xf32> to vector<16x64xf32>
    %76 = arith.mulf %73, %75 : vector<16x64xf32>
    %77 = vector.extract_strided_slice %76 {offsets = [0, 0], sizes = [16, 32], strides = [1, 1]} : vector<16x64xf32> to vector<16x32xf32>
    %78 = vector.extract_strided_slice %76 {offsets = [0, 32], sizes = [16, 32], strides = [1, 1]} : vector<16x64xf32> to vector<16x32xf32>
    %79 = vector.broadcast %43 : vector<16x1xf32> to vector<16x64xf32>
    %80 = arith.mulf %73, %79 : vector<16x64xf32>
    %81 = vector.extract_strided_slice %80 {offsets = [0, 0], sizes = [16, 32], strides = [1, 1]} : vector<16x64xf32> to vector<16x32xf32>
    %82 = vector.extract_strided_slice %80 {offsets = [0, 32], sizes = [16, 32], strides = [1, 1]} : vector<16x64xf32> to vector<16x32xf32>
    %83 = tpu.concatenate %77, %81 in 1 : vector<16x32xf32>, vector<16x32xf32> -> vector<16x64xf32>
    %84 = tpu.concatenate %78, %82 in 1 : vector<16x32xf32>, vector<16x32xf32> -> vector<16x64xf32>
    %cst_32 = arith.constant dense<0.000000e+00> : vector<64x32xf32>
    %85 = tpu.matmul %84, %74, %cst_32 {dimension_numbers = #tpu.dot_dimension_numbers<[0], [0], [1], [1], [0, 1, 1, 1], [], []>} : vector<16x64xf32>, vector<16x32xf32>, vector<64x32xf32> -> vector<64x32xf32>
    %cst_33 = arith.constant dense<0.000000e+00> : vector<16x32xf32>
    %86 = tpu.matmul %83, %85, %cst_33 {dimension_numbers = #tpu.dot_dimension_numbers<[1], [0], [0], [1], [0, 0, 1, 1], [], []>} : vector<16x64xf32>, vector<64x32xf32>, vector<16x32xf32> -> vector<16x32xf32>
    %cst_34 = arith.constant dense<0.000000e+00> : vector<16x32xf32>
    %87 = tpu.matmul %86, %47, %cst_34 {dimension_numbers = #tpu.dot_dimension_numbers<[1], [0], [0], [1], [0, 0, 1, 1], [], []>} : vector<16x32xf32>, vector<32x32xf32>, vector<16x32xf32> -> vector<16x32xf32>
    %88 = vector.broadcast %55 : vector<1x32xf32> to vector<16x32xf32>
    %89 = arith.addf %87, %88 : vector<16x32xf32>
    %90 = arith.addf %2, %89 : vector<16x32xf32>
    %cst_35 = arith.constant dense<0.000000e+00> : vector<16xf32>
    %91 = vector.multi_reduction <add>, %90, %cst_35 [1] : vector<16x32xf32> to vector<16xf32>
    %92 = vector.shape_cast %91 : vector<16xf32> to vector<16x1xf32>
    %cst_36 = arith.constant 3.200000e+01 : f32
    %93 = vector.broadcast %cst_36 : f32 to vector<16x1xf32>
    %94 = arith.divf %92, %93 : vector<16x1xf32>
    %95 = arith.mulf %90, %90 : vector<16x32xf32>
    %cst_37 = arith.constant dense<0.000000e+00> : vector<16xf32>
    %96 = vector.multi_reduction <add>, %95, %cst_37 [1] : vector<16x32xf32> to vector<16xf32>
    %97 = vector.shape_cast %96 : vector<16xf32> to vector<16x1xf32>
    %cst_38 = arith.constant 3.200000e+01 : f32
    %98 = vector.broadcast %cst_38 : f32 to vector<16x1xf32>
    %99 = arith.divf %97, %98 : vector<16x1xf32>
    %100 = arith.mulf %94, %94 : vector<16x1xf32>
    %101 = arith.subf %99, %100 : vector<16x1xf32>
    %102 = vector.broadcast %94 : vector<16x1xf32> to vector<16x32xf32>
    %103 = arith.subf %90, %102 : vector<16x32xf32>
    %cst_39 = arith.constant 9.99999974E-6 : f32
    %104 = vector.broadcast %cst_39 : f32 to vector<16x1xf32>
    %105 = arith.addf %101, %104 : vector<16x1xf32>
    %106 = math.rsqrt %105 : vector<16x1xf32>
    %107 = vector.broadcast %106 : vector<16x1xf32> to vector<16x32xf32>
    %108 = arith.mulf %103, %107 : vector<16x32xf32>
    %109 = vector.broadcast %58 : vector<1x32xf32> to vector<16x32xf32>
    %110 = arith.mulf %108, %109 : vector<16x32xf32>
    %111 = vector.broadcast %59 : vector<1x32xf32> to vector<16x32xf32>
    %112 = arith.addf %110, %111 : vector<16x32xf32>
    %cst_40 = arith.constant dense<0.000000e+00> : vector<16x64xf32>
    %113 = tpu.matmul %112, %49, %cst_40 {dimension_numbers = #tpu.dot_dimension_numbers<[1], [0], [0], [1], [0, 0, 1, 1], [], []>} : vector<16x32xf32>, vector<32x64xf32>, vector<16x64xf32> -> vector<16x64xf32>
    %114 = vector.broadcast %56 : vector<1x64xf32> to vector<16x64xf32>
    %115 = arith.addf %113, %114 : vector<16x64xf32>
    %cst_41 = arith.constant 0.000000e+00 : f32
    %116 = vector.broadcast %cst_41 : f32 to vector<16x64xf32>
    %117 = arith.maximumf %115, %116 : vector<16x64xf32>
    %cst_42 = arith.constant dense<0.000000e+00> : vector<16x32xf32>
    %118 = tpu.matmul %117, %51, %cst_42 {dimension_numbers = #tpu.dot_dimension_numbers<[1], [0], [0], [1], [0, 0, 1, 1], [], []>} : vector<16x64xf32>, vector<64x32xf32>, vector<16x32xf32> -> vector<16x32xf32>
    %119 = vector.broadcast %57 : vector<1x32xf32> to vector<16x32xf32>
    %120 = arith.addf %118, %119 : vector<16x32xf32>
    %121 = arith.addf %112, %120 : vector<16x32xf32>
    %cst_43 = arith.constant dense<0.000000e+00> : vector<16xf32>
    %122 = vector.multi_reduction <add>, %121, %cst_43 [1] : vector<16x32xf32> to vector<16xf32>
    %123 = vector.shape_cast %122 : vector<16xf32> to vector<16x1xf32>
    %cst_44 = arith.constant 3.200000e+01 : f32
    %124 = vector.broadcast %cst_44 : f32 to vector<16x1xf32>
    %125 = arith.divf %123, %124 : vector<16x1xf32>
    %126 = arith.mulf %121, %121 : vector<16x32xf32>
    %cst_45 = arith.constant dense<0.000000e+00> : vector<16xf32>
    %127 = vector.multi_reduction <add>, %126, %cst_45 [1] : vector<16x32xf32> to vector<16xf32>
    %128 = vector.shape_cast %127 : vector<16xf32> to vector<16x1xf32>
    %cst_46 = arith.constant 3.200000e+01 : f32
    %129 = vector.broadcast %cst_46 : f32 to vector<16x1xf32>
    %130 = arith.divf %128, %129 : vector<16x1xf32>
    %131 = arith.mulf %125, %125 : vector<16x1xf32>
    %132 = arith.subf %130, %131 : vector<16x1xf32>
    %133 = vector.broadcast %125 : vector<16x1xf32> to vector<16x32xf32>
    %134 = arith.subf %121, %133 : vector<16x32xf32>
    %cst_47 = arith.constant 9.99999974E-6 : f32
    %135 = vector.broadcast %cst_47 : f32 to vector<16x1xf32>
    %136 = arith.addf %132, %135 : vector<16x1xf32>
    %137 = math.rsqrt %136 : vector<16x1xf32>
    %138 = vector.broadcast %137 : vector<16x1xf32> to vector<16x32xf32>
    %139 = arith.mulf %134, %138 : vector<16x32xf32>
    %140 = vector.broadcast %60 : vector<1x32xf32> to vector<16x32xf32>
    %141 = arith.mulf %139, %140 : vector<16x32xf32>
    %142 = vector.broadcast %61 : vector<1x32xf32> to vector<16x32xf32>
    %143 = arith.addf %141, %142 : vector<16x32xf32>
    %c1 = arith.constant 1 : index
    %c0_48 = arith.constant 0 : index
    %c0_49 = arith.constant 0 : index
    %144 = vector.load %arg2[%c1, %c0_48, %c0_49] : memref<2x32x96xf32, #tpu.memory_space<vmem>>, vector<1x32x96xf32>
    %145 = vector.shape_cast %144 : vector<1x32x96xf32> to vector<32x96xf32>
    %c1_50 = arith.constant 1 : index
    %c0_51 = arith.constant 0 : index
    %c0_52 = arith.constant 0 : index
    %146 = vector.load %arg3[%c1_50, %c0_51, %c0_52] : memref<2x32x32xf32, #tpu.memory_space<vmem>>, vector<1x32x32xf32>
    %147 = vector.shape_cast %146 : vector<1x32x32xf32> to vector<32x32xf32>
    %c1_53 = arith.constant 1 : index
    %c0_54 = arith.constant 0 : index
    %c0_55 = arith.constant 0 : index
    %148 = vector.load %arg4[%c1_53, %c0_54, %c0_55] : memref<2x32x64xf32, #tpu.memory_space<vmem>>, vector<1x32x64xf32>
    %149 = vector.shape_cast %148 : vector<1x32x64xf32> to vector<32x64xf32>
    %c1_56 = arith.constant 1 : index
    %c0_57 = arith.constant 0 : index
    %c0_58 = arith.constant 0 : index
    %150 = vector.load %arg5[%c1_56, %c0_57, %c0_58] : memref<2x64x32xf32, #tpu.memory_space<vmem>>, vector<1x64x32xf32>
    %151 = vector.shape_cast %150 : vector<1x64x32xf32> to vector<64x32xf32>
    %c1_59 = arith.constant 1 : index
    %c0_60 = arith.constant 0 : index
    %c0_61 = arith.constant 0 : index
    %152 = vector.load %arg6[%c1_59, %c0_60, %c0_61] : memref<2x8x96xf32, #tpu.memory_space<vmem>>, vector<1x8x96xf32>
    %153 = vector.shape_cast %152 : vector<1x8x96xf32> to vector<8x96xf32>
    %154 = vector.extract_strided_slice %153 {offsets = [0, 0], sizes = [1, 96], strides = [1, 1]} : vector<8x96xf32> to vector<1x96xf32>
    %155 = vector.extract_strided_slice %153 {offsets = [1, 0], sizes = [1, 32], strides = [1, 1]} : vector<8x96xf32> to vector<1x32xf32>
    %156 = vector.extract_strided_slice %153 {offsets = [2, 0], sizes = [1, 64], strides = [1, 1]} : vector<8x96xf32> to vector<1x64xf32>
    %157 = vector.extract_strided_slice %153 {offsets = [3, 0], sizes = [1, 32], strides = [1, 1]} : vector<8x96xf32> to vector<1x32xf32>
    %158 = vector.extract_strided_slice %153 {offsets = [4, 0], sizes = [1, 32], strides = [1, 1]} : vector<8x96xf32> to vector<1x32xf32>
    %159 = vector.extract_strided_slice %153 {offsets = [5, 0], sizes = [1, 32], strides = [1, 1]} : vector<8x96xf32> to vector<1x32xf32>
    %160 = vector.extract_strided_slice %153 {offsets = [6, 0], sizes = [1, 32], strides = [1, 1]} : vector<8x96xf32> to vector<1x32xf32>
    %161 = vector.extract_strided_slice %153 {offsets = [7, 0], sizes = [1, 32], strides = [1, 1]} : vector<8x96xf32> to vector<1x32xf32>
    %cst_62 = arith.constant dense<0.000000e+00> : vector<16x96xf32>
    %162 = tpu.matmul %143, %145, %cst_62 {dimension_numbers = #tpu.dot_dimension_numbers<[1], [0], [0], [1], [0, 0, 1, 1], [], []>} : vector<16x32xf32>, vector<32x96xf32>, vector<16x96xf32> -> vector<16x96xf32>
    %163 = vector.broadcast %154 : vector<1x96xf32> to vector<16x96xf32>
    %164 = arith.addf %162, %163 : vector<16x96xf32>
    %165 = vector.extract_strided_slice %164 {offsets = [0, 0], sizes = [16, 64], strides = [1, 1]} : vector<16x96xf32> to vector<16x64xf32>
    %cst_63 = arith.constant 0.000000e+00 : f32
    %166 = vector.broadcast %cst_63 : f32 to vector<16x64xf32>
    %167 = arith.cmpf ogt, %165, %166 : vector<16x64xf32>
    %cst_64 = arith.constant 1.000000e+00 : f32
    %168 = vector.broadcast %cst_64 : f32 to vector<16x64xf32>
    %169 = arith.addf %165, %168 : vector<16x64xf32>
    %cst_65 = arith.constant 0.000000e+00 : f32
    %170 = vector.broadcast %cst_65 : f32 to vector<16x64xf32>
    %171 = arith.minimumf %165, %170 : vector<16x64xf32>
    %172 = math.exp %171 : vector<16x64xf32>
    %173 = arith.select %167, %169, %172 : vector<16x64xi1>, vector<16x64xf32>
    %174 = vector.extract_strided_slice %164 {offsets = [0, 64], sizes = [16, 32], strides = [1, 1]} : vector<16x96xf32> to vector<16x32xf32>
    %175 = vector.broadcast %23 : vector<16x1xf32> to vector<16x64xf32>
    %176 = arith.mulf %173, %175 : vector<16x64xf32>
    %177 = vector.extract_strided_slice %176 {offsets = [0, 0], sizes = [16, 32], strides = [1, 1]} : vector<16x64xf32> to vector<16x32xf32>
    %178 = vector.extract_strided_slice %176 {offsets = [0, 32], sizes = [16, 32], strides = [1, 1]} : vector<16x64xf32> to vector<16x32xf32>
    %179 = vector.broadcast %43 : vector<16x1xf32> to vector<16x64xf32>
    %180 = arith.mulf %173, %179 : vector<16x64xf32>
    %181 = vector.extract_strided_slice %180 {offsets = [0, 0], sizes = [16, 32], strides = [1, 1]} : vector<16x64xf32> to vector<16x32xf32>
    %182 = vector.extract_strided_slice %180 {offsets = [0, 32], sizes = [16, 32], strides = [1, 1]} : vector<16x64xf32> to vector<16x32xf32>
    %183 = tpu.concatenate %177, %181 in 1 : vector<16x32xf32>, vector<16x32xf32> -> vector<16x64xf32>
    %184 = tpu.concatenate %178, %182 in 1 : vector<16x32xf32>, vector<16x32xf32> -> vector<16x64xf32>
    %cst_66 = arith.constant dense<0.000000e+00> : vector<64x32xf32>
    %185 = tpu.matmul %184, %174, %cst_66 {dimension_numbers = #tpu.dot_dimension_numbers<[0], [0], [1], [1], [0, 1, 1, 1], [], []>} : vector<16x64xf32>, vector<16x32xf32>, vector<64x32xf32> -> vector<64x32xf32>
    %cst_67 = arith.constant dense<0.000000e+00> : vector<16x32xf32>
    %186 = tpu.matmul %183, %185, %cst_67 {dimension_numbers = #tpu.dot_dimension_numbers<[1], [0], [0], [1], [0, 0, 1, 1], [], []>} : vector<16x64xf32>, vector<64x32xf32>, vector<16x32xf32> -> vector<16x32xf32>
    %cst_68 = arith.constant dense<0.000000e+00> : vector<16x32xf32>
    %187 = tpu.matmul %186, %147, %cst_68 {dimension_numbers = #tpu.dot_dimension_numbers<[1], [0], [0], [1], [0, 0, 1, 1], [], []>} : vector<16x32xf32>, vector<32x32xf32>, vector<16x32xf32> -> vector<16x32xf32>
    %188 = vector.broadcast %155 : vector<1x32xf32> to vector<16x32xf32>
    %189 = arith.addf %187, %188 : vector<16x32xf32>
    %190 = arith.addf %143, %189 : vector<16x32xf32>
    %cst_69 = arith.constant dense<0.000000e+00> : vector<16xf32>
    %191 = vector.multi_reduction <add>, %190, %cst_69 [1] : vector<16x32xf32> to vector<16xf32>
    %192 = vector.shape_cast %191 : vector<16xf32> to vector<16x1xf32>
    %cst_70 = arith.constant 3.200000e+01 : f32
    %193 = vector.broadcast %cst_70 : f32 to vector<16x1xf32>
    %194 = arith.divf %192, %193 : vector<16x1xf32>
    %195 = arith.mulf %190, %190 : vector<16x32xf32>
    %cst_71 = arith.constant dense<0.000000e+00> : vector<16xf32>
    %196 = vector.multi_reduction <add>, %195, %cst_71 [1] : vector<16x32xf32> to vector<16xf32>
    %197 = vector.shape_cast %196 : vector<16xf32> to vector<16x1xf32>
    %cst_72 = arith.constant 3.200000e+01 : f32
    %198 = vector.broadcast %cst_72 : f32 to vector<16x1xf32>
    %199 = arith.divf %197, %198 : vector<16x1xf32>
    %200 = arith.mulf %194, %194 : vector<16x1xf32>
    %201 = arith.subf %199, %200 : vector<16x1xf32>
    %202 = vector.broadcast %194 : vector<16x1xf32> to vector<16x32xf32>
    %203 = arith.subf %190, %202 : vector<16x32xf32>
    %cst_73 = arith.constant 9.99999974E-6 : f32
    %204 = vector.broadcast %cst_73 : f32 to vector<16x1xf32>
    %205 = arith.addf %201, %204 : vector<16x1xf32>
    %206 = math.rsqrt %205 : vector<16x1xf32>
    %207 = vector.broadcast %206 : vector<16x1xf32> to vector<16x32xf32>
    %208 = arith.mulf %203, %207 : vector<16x32xf32>
    %209 = vector.broadcast %158 : vector<1x32xf32> to vector<16x32xf32>
    %210 = arith.mulf %208, %209 : vector<16x32xf32>
    %211 = vector.broadcast %159 : vector<1x32xf32> to vector<16x32xf32>
    %212 = arith.addf %210, %211 : vector<16x32xf32>
    %cst_74 = arith.constant dense<0.000000e+00> : vector<16x64xf32>
    %213 = tpu.matmul %212, %149, %cst_74 {dimension_numbers = #tpu.dot_dimension_numbers<[1], [0], [0], [1], [0, 0, 1, 1], [], []>} : vector<16x32xf32>, vector<32x64xf32>, vector<16x64xf32> -> vector<16x64xf32>
    %214 = vector.broadcast %156 : vector<1x64xf32> to vector<16x64xf32>
    %215 = arith.addf %213, %214 : vector<16x64xf32>
    %cst_75 = arith.constant 0.000000e+00 : f32
    %216 = vector.broadcast %cst_75 : f32 to vector<16x64xf32>
    %217 = arith.maximumf %215, %216 : vector<16x64xf32>
    %cst_76 = arith.constant dense<0.000000e+00> : vector<16x32xf32>
    %218 = tpu.matmul %217, %151, %cst_76 {dimension_numbers = #tpu.dot_dimension_numbers<[1], [0], [0], [1], [0, 0, 1, 1], [], []>} : vector<16x64xf32>, vector<64x32xf32>, vector<16x32xf32> -> vector<16x32xf32>
    %219 = vector.broadcast %157 : vector<1x32xf32> to vector<16x32xf32>
    %220 = arith.addf %218, %219 : vector<16x32xf32>
    %221 = arith.addf %212, %220 : vector<16x32xf32>
    %cst_77 = arith.constant dense<0.000000e+00> : vector<16xf32>
    %222 = vector.multi_reduction <add>, %221, %cst_77 [1] : vector<16x32xf32> to vector<16xf32>
    %223 = vector.shape_cast %222 : vector<16xf32> to vector<16x1xf32>
    %cst_78 = arith.constant 3.200000e+01 : f32
    %224 = vector.broadcast %cst_78 : f32 to vector<16x1xf32>
    %225 = arith.divf %223, %224 : vector<16x1xf32>
    %226 = arith.mulf %221, %221 : vector<16x32xf32>
    %cst_79 = arith.constant dense<0.000000e+00> : vector<16xf32>
    %227 = vector.multi_reduction <add>, %226, %cst_79 [1] : vector<16x32xf32> to vector<16xf32>
    %228 = vector.shape_cast %227 : vector<16xf32> to vector<16x1xf32>
    %cst_80 = arith.constant 3.200000e+01 : f32
    %229 = vector.broadcast %cst_80 : f32 to vector<16x1xf32>
    %230 = arith.divf %228, %229 : vector<16x1xf32>
    %231 = arith.mulf %225, %225 : vector<16x1xf32>
    %232 = arith.subf %230, %231 : vector<16x1xf32>
    %233 = vector.broadcast %225 : vector<16x1xf32> to vector<16x32xf32>
    %234 = arith.subf %221, %233 : vector<16x32xf32>
    %cst_81 = arith.constant 9.99999974E-6 : f32
    %235 = vector.broadcast %cst_81 : f32 to vector<16x1xf32>
    %236 = arith.addf %232, %235 : vector<16x1xf32>
    %237 = math.rsqrt %236 : vector<16x1xf32>
    %238 = vector.broadcast %237 : vector<16x1xf32> to vector<16x32xf32>
    %239 = arith.mulf %234, %238 : vector<16x32xf32>
    %240 = vector.broadcast %160 : vector<1x32xf32> to vector<16x32xf32>
    %241 = arith.mulf %239, %240 : vector<16x32xf32>
    %242 = vector.broadcast %161 : vector<1x32xf32> to vector<16x32xf32>
    %243 = arith.addf %241, %242 : vector<16x32xf32>
    %c0_82 = arith.constant 0 : index
    %c0_83 = arith.constant 0 : index
    %244 = vector.load %arg7[%c0_82, %c0_83] : memref<16x32xf32, #tpu.memory_space<vmem>>, vector<16x32xf32>
    tpu.vector_store %arg7[%c0_82, %c0_83], %243 {strides = array<i32>} : memref<16x32xf32, #tpu.memory_space<vmem>>, vector<16x32xf32>,
    return
  }
}

</mosaic_0001>

<llo_original>
// kernel: transformer_encoder_forward.1
$region0: #{transformer_encoder_forward.1}
  #allocation0 [shape = 'u32[]', space=smem, size = 0x4, offset = 0x4, fixed_abs, tag = 'smem constant byte address 0x4 - core index']
  #allocation1 [shape = 'u32[144,128]{1,0:T(1,128)}', space=vmem, size = 0x12000, scoped, tag = 'internal scratch']
  %s0 = inlined_call_operand.hbm [shape: f32[16,32], index: 0, kind: input, shape index: {}]
  %s1 = inlined_call_operand.hbm [shape: f32[16,32], index: 1, kind: input, shape index: {}]
  %s2 = inlined_call_operand.vmem [shape: f32[2,32,96], index: 2, kind: input, shape index: {}]
  %s3 = inlined_call_operand.vmem [shape: f32[2,32,32], index: 3, kind: input, shape index: {}]
  %s4 = inlined_call_operand.vmem [shape: f32[2,32,64], index: 4, kind: input, shape index: {}]
  %s5 = inlined_call_operand.vmem [shape: f32[2,64,32], index: 5, kind: input, shape index: {}]
  %s6 = inlined_call_operand.vmem [shape: f32[2,8,96], index: 6, kind: input, shape index: {}]
  %s7 = inlined_call_operand.hbm [shape: f32[16,32], index: 7, kind: output, shape index: {}]
  %s8 = sld [smem:[#allocation0]]
  $region46: #{transformer_encoder_forward.1} parent=0
    _
  %s10 = ssub.s32 1, %s8
  %s11 = scalar_select 0, %s10, %s8
  $region1: #{transformer_encoder_forward.1} parent=0
    #allocation2 [shape = 'u8[8192]{0}', space=vmem, size = 0x2000, scoped, tag = 'input window, operand 0, single buffered']
    #allocation3 [shape = 's32[1]{0}', space=sflag, size = 0x4, scoped, tag = 'scoped memory for transformer_encoder_forward.1']
    #allocation4 [shape = 's32[1]{0}', space=sflag, size = 0x4, scoped, tag = 'scoped memory for transformer_encoder_forward.1']
    #allocation5 [shape = 'u8[8192]{0}', space=vmem, size = 0x2000, scoped, tag = 'input window, operand 1, single buffered']
    #allocation6 [shape = 's32[1]{0}', space=sflag, size = 0x4, scoped, tag = 'scoped memory for transformer_encoder_forward.1']
    #allocation7 [shape = 'u8[8192]{0}', space=vmem, size = 0x2000, scoped, tag = 'output window, operand 0, single buffered']
    %12 = vsyncpa [#allocation3], 0
    %13 = vsyncpa [#allocation6], 0
    %14 = vsyncpa [#allocation4], 0
    // Predicated region
    $region2: #{transformer_encoder_forward.1} parent=1 // pred_check
      _
    $region3: #{transformer_encoder_forward.1} parent=1 // pred_check_branch
      %16 = sbr.rel (0) target = $region5
    $region4: #{transformer_encoder_forward.1} parent=1 // pred_region
      %s18 = ssub.s32 256, 256
      %19 = vsyncadd [#allocation3], %s18
      %s20 = sshll.u32 [#allocation2], 4
      %s21 = int_to_ptr.vmem [resolvable:$true] %s20
      %26 = dma.hbm_to_vmem [thread:$0]  %s0, 256, %s21, [#allocation3], 128, 128, 8
    $region5: #{transformer_encoder_forward.1} parent=1 // pred_fallthru
      _
    // Predicated region
    $region6: #{transformer_encoder_forward.1} parent=1 // pred_check
      _
    $region7: #{transformer_encoder_forward.1} parent=1 // pred_check_branch
      %28 = sbr.rel (0) target = $region9
    $region8: #{transformer_encoder_forward.1} parent=1 // pred_region
      %s30 = ssub.s32 256, 256
      %31 = vsyncadd [#allocation6], %s30
      %s32 = sshll.u32 [#allocation5], 4
      %s33 = int_to_ptr.vmem [resolvable:$true] %s32
      %38 = dma.hbm_to_vmem [thread:$0]  %s1, 256, %s33, [#allocation6], 128, 128, 8
    $region9: #{transformer_encoder_forward.1} parent=1 // pred_fallthru
      _
    // Predicated region
    $region10: #{transformer_encoder_forward.1} parent=1 // pred_check
      _
    $region11: #{transformer_encoder_forward.1} parent=1 // pred_check_branch
      %40 = sbr.rel (0) target = $region13
    $region12: #{transformer_encoder_forward.1} parent=1 // pred_region
      _
    $region13: #{transformer_encoder_forward.1} parent=1 // pred_fallthru
      _
    // Predicated region
    $region14: #{transformer_encoder_forward.1} parent=1 // pred_check
      _
    $region15: #{transformer_encoder_forward.1} parent=1 // pred_check_branch
      %42 = sbr.rel (0) target = $region17
    $region16: #{transformer_encoder_forward.1} parent=1 // pred_region
      _
    $region17: #{transformer_encoder_forward.1} parent=1 // pred_fallthru
      _
    // Predicated region
    $region18: #{transformer_encoder_forward.1} parent=1 // pred_check
      _
    $region19: #{transformer_encoder_forward.1} parent=1 // pred_check_branch
      %44 = sbr.rel (0) target = $region21
    $region20: #{transformer_encoder_forward.1} parent=1 // pred_region
      _
    $region21: #{transformer_encoder_forward.1} parent=1 // pred_fallthru
      _
    // Predicated region
    $region22: #{transformer_encoder_forward.1} parent=1 // pred_check
      _
    $region23: #{transformer_encoder_forward.1} parent=1 // pred_check_branch
      %46 = sbr.rel (0) target = $region25
    $region24: #{transformer_encoder_forward.1} parent=1 // pred_region
      _
    $region25: #{transformer_encoder_forward.1} parent=1 // pred_fallthru
      _
    // Predicated region
    $region26: #{transformer_encoder_forward.1} parent=1 // pred_check
      _
    $region27: #{transformer_encoder_forward.1} parent=1 // pred_check_branch
      %48 = sbr.rel (0) target = $region29
    $region28: #{transformer_encoder_forward.1} parent=1 // pred_region
      _
    $region29: #{transformer_encoder_forward.1} parent=1 // pred_fallthru
      _
    // Predicated region
    $region30: #{transformer_encoder_forward.1} parent=1 // pred_check
      _
    $region31: #{transformer_encoder_forward.1} parent=1 // pred_check_branch
      %50 = sbr.rel (0) target = $region33
    $region32: #{transformer_encoder_forward.1} parent=1 // pred_region
      %51 = dma.done [#allocation3], 256
    $region33: #{transformer_encoder_forward.1} parent=1 // pred_fallthru
      _
    // Predicated region
    $region34: #{transformer_encoder_forward.1} parent=1 // pred_check
      _
    $region35: #{transformer_encoder_forward.1} parent=1 // pred_check_branch
      %53 = sbr.rel (0) target = $region37
    $region36: #{transformer_encoder_forward.1} parent=1 // pred_region
      %54 = dma.done [#allocation6], 256
    $region37: #{transformer_encoder_forward.1} parent=1 // pred_fallthru
      _
    %v55 = vld [vmem:[#allocation2] sm:$0xff]
    %v56 = vld [vmem:[#allocation2 + $0x8] sm:$0xff]
    %v57 = vld [vmem:[#allocation5] sm:$0xff]
    %v58 = vld [vmem:[#allocation5 + $0x8] sm:$0xff]
    %v59 = vadd.f32 %v55, %v57
    %v60 = vadd.f32 %v56, %v58
    %v61 = vlaneseq
    %v62 = vshrl.u32 %v61, 7
    %v63 = vadd.s32 %v62, 8
    %vm64 = vcmp.lt.s32.totalorder %v62, 0
    %v65 = vsub.s32 0, %v62
    %v66 = vsel %vm64, %v65, %v62
    %v67 = vshrl.u32 %v66, 1
    %v68 = vand.u32 %v66, 1
    %v69 = vsub.s32 0, %v68
    %v70 = vsel %vm64, %v69, %v68
    %vm71 = vcmp.lt.s32.totalorder %v63, 0
    %v72 = vsub.s32 0, %v63
    %v73 = vsel %vm71, %v72, %v63
    %v74 = vshrl.u32 %v73, 1
    %v75 = vand.u32 %v73, 1
    %v76 = vsub.s32 0, %v75
    %v77 = vsel %vm71, %v76, %v75
    %vm78 = vcmp.ne.s32.totalorder %v70, 0
    %vm79 = vcmp.ne.s32.totalorder %v77, 0
    %vm80 = vcmp.lt.s32.totalorder %v70, 0
    %vm81 = vcmp.lt.s32.totalorder %v77, 0
    %vm82 = vmand %vm80, %vm78
    %vm83 = vmand %vm81, %vm79
    %v84 = vadd.s32 %v70, 2
    %v85 = vadd.s32 %v77, 2
    %v86 = vsel %vm82, %v84, %v70
    %v87 = vsel %vm83, %v85, %v77
    %vm88 = vcmp.eq.s32.totalorder %v86, 0
    %vm89 = vcmp.eq.s32.totalorder %v87, 0
    %v90 = vsel %vm88, 1, 0
    %v91 = vsel %vm89, 1, 0
    %v92 = vcvt.s32.f32 %v90
    %v93 = vcvt.s32.f32 %v91
    %vm94 = vcmp.eq.s32.totalorder %v86, 1
    %vm95 = vcmp.eq.s32.totalorder %v87, 1
    %v96 = vsel %vm94, 1, 0
    %v97 = vsel %vm95, 1, 0
    %v98 = vcvt.s32.f32 %v96
    %v99 = vcvt.s32.f32 %v97
    %v100 = vld [vmem:[%s2] sm:$0xff]
    %v101 = vld [vmem:[%s2 + $0x8] sm:$0xff]
    %v102 = vld [vmem:[%s2 + $0x10] sm:$0xff]
    %v103 = vld [vmem:[%s2 + $0x18] sm:$0xff]
    %v104 = vld [vmem:[%s3] sm:$0xff]
    %v105 = vld [vmem:[%s3 + $0x8] sm:$0xff]
    %v106 = vld [vmem:[%s3 + $0x10] sm:$0xff]
    %v107 = vld [vmem:[%s3 + $0x18] sm:$0xff]
    %v108 = vld [vmem:[%s4] sm:$0xff]
    %v109 = vld [vmem:[%s4 + $0x8] sm:$0xff]
    %v110 = vld [vmem:[%s4 + $0x10] sm:$0xff]
    %v111 = vld [vmem:[%s4 + $0x18] sm:$0xff]
    %v112 = vld [vmem:[%s5] sm:$0xff]
    %v113 = vld [vmem:[%s5 + $0x8] sm:$0xff]
    %v114 = vld [vmem:[%s5 + $0x10] sm:$0xff]
    %v115 = vld [vmem:[%s5 + $0x18] sm:$0xff]
    %v116 = vld [vmem:[%s5 + $0x20] sm:$0xff]
    %v117 = vld [vmem:[%s5 + $0x28] sm:$0xff]
    %v118 = vld [vmem:[%s5 + $0x30] sm:$0xff]
    %v119 = vld [vmem:[%s5 + $0x38] sm:$0xff]
    %v120 = vld [vmem:[%s6] sm:$0xff]
    %v121 = vlaneseq
    %v122 = vshrl.u32 %v121, 7
    %v123 = vsub.s32 0, %v122
    %v124 = vrot.slane %v120, %v123
    %vm125 = vcmask 261120
    %v127 = vsel %vm125, %v59, 0
    %v130 = vsel %vm125, %v60, 0
    %132 = vmatprep.subr.mxu0 0.0
    %133 = vmatpush1.msra.mxu0 %v100
    %134 = vmatprep.subr.mxu0 0.0
    %135 = vmatpush1.msra.mxu0 %v101
    %136 = vmatprep.subr.mxu0 0.0
    %137 = vmatpush1.msra.mxu0 %v102
    %138 = vmatprep.subr.mxu0 0.0
    %139 = vmatpush1.msra.mxu0 %v103
    %140 = vmatprep.subr.mxu0 0.0
    %141 = vmatpush1.msra.mxu0 0.0
    %142 = vmatprep.subr.mxu0 0.0
    %143 = vmatpush1.msra.mxu0 0.0
    %144 = vmatprep.subr.mxu0 0.0
    %145 = vmatpush1.msra.mxu0 0.0
    %146 = vmatprep.subr.mxu0 0.0
    %147 = vmatpush1.msra.mxu0 0.0
    %148 = vmatprep.subr.mxu0 0.0
    %149 = vmatpush1.msra.mxu0 0.0
    %150 = vmatprep.subr.mxu0 0.0
    %151 = vmatpush1.msra.mxu0 0.0
    %152 = vmatprep.subr.mxu0 0.0
    %153 = vmatpush1.msra.mxu0 0.0
    %154 = vmatprep.subr.mxu0 0.0
    %155 = vmatpush1.msra.mxu0 0.0
    %156 = vmatprep.subr.mxu0 0.0
    %157 = vmatpush1.msra.mxu0 0.0
    %158 = vmatprep.subr.mxu0 0.0
    %159 = vmatpush1.msra.mxu0 0.0
    %160 = vmatprep.subr.mxu0 0.0
    %161 = vmatpush1.msra.mxu0 0.0
    %162 = vmatprep.subr.mxu0 0.0
    %163 = vmatpush1.msra.mxu0 0.0
    %164 = vmatprep.subr.mxu0 0.0
    %165 = vmatpush1.msra.mxu0 0.0
    %166 = vmatprep.subr.mxu0 0.0
    %167 = vmatpush1.msra.mxu0 0.0
    %168 = vmatprep.subr.mxu0 0.0
    %169 = vmatpush1.msra.mxu0 0.0
    %170 = vmatprep.subr.mxu0 0.0
    %171 = vmatpush1.msra.mxu0 0.0
    %172 = vmatprep.subr.mxu0 0.0
    %173 = vmatpush1.msra.mxu0 0.0
    %174 = vmatprep.subr.mxu0 0.0
    %175 = vmatpush1.msra.mxu0 0.0
    %176 = vmatprep.subr.mxu0 0.0
    %177 = vmatpush1.msra.mxu0 0.0
    %178 = vmatprep.subr.mxu0 0.0
    %179 = vmatpush1.msra.mxu0 0.0
    %180 = vmatprep.subr.mxu0 0.0
    %181 = vmatpush1.msra.mxu0 0.0
    %182 = vmatprep.subr.mxu0 0.0
    %183 = vmatpush1.msra.mxu0 0.0
    %184 = vmatprep.subr.mxu0 0.0
    %185 = vmatpush1.msra.mxu0 0.0
    %186 = vmatprep.subr.mxu0 0.0
    %187 = vmatpush1.msra.mxu0 0.0
    %188 = vmatprep.subr.mxu0 0.0
    %189 = vmatpush1.msra.mxu0 0.0
    %190 = vmatprep.subr.mxu0 0.0
    %191 = vmatpush1.msra.mxu0 0.0
    %192 = vmatprep.subr.mxu0 0.0
    %193 = vmatpush1.msra.mxu0 0.0
    %194 = vmatprep.subr.mxu0 0.0
    %195 = vmatpush1.msra.mxu0 0.0
    %196 = vmatprep.mubr.f32.mxu0 0.0
    %197 = vmatmul.mubr.f32.gmra.mrb[0].mxu0 %v127
    %v198 = vpop.f32.mrb[0].mxu0
    %v199 = vadd.f32 %v124, %v198
    %v200 = vpop.f32.mrb[0].mxu0
    %201 = vmatprep.mubr.f32.mxu0 0.0
    %202 = vmatmul.mubr.f32.gmra.mrb[0].mxu0 %v130
    %v203 = vpop.f32.mrb[0].mxu0
    %v204 = vadd.f32 %v124, %v203
    %v205 = vpop.f32.mrb[0].mxu0
    %206 = vdwg.mxu0
    %vm207 = vcmp.gt.f32.partialorder %v199, 0.0
    %vm208 = vcmp.gt.f32.partialorder %v204, 0.0
    %v209 = vadd.f32 %v199, 1.0
    %v210 = vadd.f32 %v204, 1.0
    %v211 = vmin.f32 %v199, 0.0
    %v212 = vmin.f32 %v204, 0.0
    %v213 = vmul.f32 %v211, 1.442695
    %v214 = vpow.pop %v213
    %v215 = vmul.f32 %v212, 1.442695
    %v216 = vpow.pop %v215
    %v217 = vsel %vm207, %v209, %v214
    %v218 = vsel %vm208, %v210, %v216
    %v219 = vmul.f32 %v217, %v92
    %v220 = vmul.f32 %v218, %v93
    %v221 = vmul.f32 %v217, %v98
    %v222 = vmul.f32 %v218, %v99
    %225 = vrot.lane.b32.xlu0 %v221, 32
    %v226 = vpop.permute.xlu0 %225
    %227 = vrot.lane.b32.xlu0 %v222, 32
    %v228 = vpop.permute.xlu0 %227
    %v231 = vsel %vm125, %v219, %v226
    %v232 = vsel %vm125, %v220, %v228
    %235 = vrot.lane.b32.xlu0 %v219, 96
    %v236 = vpop.permute.xlu0 %235
    %237 = vrot.lane.b32.xlu0 %v220, 96
    %v238 = vpop.permute.xlu0 %237
    %v241 = vsel %vm125, %v236, %v221
    %v242 = vsel %vm125, %v238, %v222
    %243 = vxpose.xlu0.b32.start [1/16] %v241, 128
    %244 = vxpose.xlu0.b32.cont [2/16] %v242, 128
    %245 = vxpose.xlu0.b32.cont [3/16] 0.0, 128
    %246 = vxpose.xlu0.b32.cont [4/16] 0.0, 128
    %247 = vxpose.xlu0.b32.cont [5/16] 0.0, 128
    %248 = vxpose.xlu0.b32.cont [6/16] 0.0, 128
    %249 = vxpose.xlu0.b32.cont [7/16] 0.0, 128
    %250 = vxpose.xlu0.b32.cont [8/16] 0.0, 128
    %251 = vxpose.xlu0.b32.cont [9/16] 0.0, 128
    %252 = vxpose.xlu0.b32.cont [10/16] 0.0, 128
    %253 = vxpose.xlu0.b32.cont [11/16] 0.0, 128
    %254 = vxpose.xlu0.b32.cont [12/16] 0.0, 128
    %255 = vxpose.xlu0.b32.cont [13/16] 0.0, 128
    %256 = vxpose.xlu0.b32.cont [14/16] 0.0, 128
    %257 = vxpose.xlu0.b32.cont [15/16] 0.0, 128
    %258 = vxpose.xlu0.b32.end [16/16] 0.0, 128
    %v259 = vpop.trf.xlu0
    %v260 = vpop.trf.xlu0
    %v261 = vpop.trf.xlu0
    %v262 = vpop.trf.xlu0
    %v263 = vpop.trf.xlu0
    %v264 = vpop.trf.xlu0
    %v265 = vpop.trf.xlu0
    %v266 = vpop.trf.xlu0
    %v267 = vpop.trf.xlu0
    %v268 = vpop.trf.xlu0
    %v269 = vpop.trf.xlu0
    %v270 = vpop.trf.xlu0
    %v271 = vpop.trf.xlu0
    %v272 = vpop.trf.xlu0
    %v273 = vpop.trf.xlu0
    %v274 = vpop.trf.xlu0
    %277 = vrot.lane.b32.xlu0 %v199, 64
    %v278 = vpop.permute.xlu0 %277
    %279 = vrot.lane.b32.xlu0 %v204, 64
    %v280 = vpop.permute.xlu0 %279
    %vm283 = vcmask 130048
    %v285 = vsel %vm283, %v259, 0
    %v288 = vsel %vm283, %v260, 0
    %v291 = vsel %vm283, %v261, 0
    %v294 = vsel %vm283, %v262, 0
    %v297 = vsel %vm283, %v263, 0
    %v300 = vsel %vm283, %v264, 0
    %v303 = vsel %vm283, %v265, 0
    %v306 = vsel %vm283, %v266, 0
    %308 = vmatprep.subr.mxu0 0.0
    %309 = vmatpush1.msra.mxu0 %v278
    %310 = vmatprep.subr.mxu0 0.0
    %311 = vmatpush1.msra.mxu0 %v280
    %312 = vmatprep.subr.mxu0 0.0
    %313 = vmatpush1.msra.mxu0 0.0
    %314 = vmatprep.subr.mxu0 0.0
    %315 = vmatpush1.msra.mxu0 0.0
    %316 = vmatprep.subr.mxu0 0.0
    %317 = vmatpush1.msra.mxu0 0.0
    %318 = vmatprep.subr.mxu0 0.0
    %319 = vmatpush1.msra.mxu0 0.0
    %320 = vmatprep.subr.mxu0 0.0
    %321 = vmatpush1.msra.mxu0 0.0
    %322 = vmatprep.subr.mxu0 0.0
    %323 = vmatpush1.msra.mxu0 0.0
    %324 = vmatprep.subr.mxu0 0.0
    %325 = vmatpush1.msra.mxu0 0.0
    %326 = vmatprep.subr.mxu0 0.0
    %327 = vmatpush1.msra.mxu0 0.0
    %328 = vmatprep.subr.mxu0 0.0
    %329 = vmatpush1.msra.mxu0 0.0
    %330 = vmatprep.subr.mxu0 0.0
    %331 = vmatpush1.msra.mxu0 0.0
    %332 = vmatprep.subr.mxu0 0.0
    %333 = vmatpush1.msra.mxu0 0.0
    %334 = vmatprep.subr.mxu0 0.0
    %335 = vmatpush1.msra.mxu0 0.0
    %336 = vmatprep.subr.mxu0 0.0
    %337 = vmatpush1.msra.mxu0 0.0
    %338 = vmatprep.subr.mxu0 0.0
    %339 = vmatpush1.msra.mxu0 0.0
    %340 = vmatprep.subr.mxu0 0.0
    %341 = vmatpush1.msra.mxu0 0.0
    %342 = vmatprep.subr.mxu0 0.0
    %343 = vmatpush1.msra.mxu0 0.0
    %344 = vmatprep.subr.mxu0 0.0
    %345 = vmatpush1.msra.mxu0 0.0
    %346 = vmatprep.subr.mxu0 0.0
    %347 = vmatpush1.msra.mxu0 0.0
    %348 = vmatprep.subr.mxu0 0.0
    %349 = vmatpush1.msra.mxu0 0.0
    %350 = vmatprep.subr.mxu0 0.0
    %351 = vmatpush1.msra.mxu0 0.0
    %352 = vmatprep.subr.mxu0 0.0
    %353 = vmatpush1.msra.mxu0 0.0
    %354 = vmatprep.subr.mxu0 0.0
    %355 = vmatpush1.msra.mxu0 0.0
    %356 = vmatprep.subr.mxu0 0.0
    %357 = vmatpush1.msra.mxu0 0.0
    %358 = vmatprep.subr.mxu0 0.0
    %359 = vmatpush1.msra.mxu0 0.0
    %360 = vmatprep.subr.mxu0 0.0
    %361 = vmatpush1.msra.mxu0 0.0
    %362 = vmatprep.subr.mxu0 0.0
    %363 = vmatpush1.msra.mxu0 0.0
    %364 = vmatprep.subr.mxu0 0.0
    %365 = vmatpush1.msra.mxu0 0.0
    %366 = vmatprep.subr.mxu0 0.0
    %367 = vmatpush1.msra.mxu0 0.0
    %368 = vmatprep.subr.mxu0 0.0
    %369 = vmatpush1.msra.mxu0 0.0
    %370 = vmatprep.subr.mxu0 0.0
    %371 = vmatpush1.msra.mxu0 0.0
    %372 = vmatprep.mubr.f32.mxu0 0.0
    %373 = vmatmul.mubr.f32.gmra.mrb[0].mxu0 %v285
    %v374 = vpop.f32.mrb[0].mxu0
    %v375 = vadd.f32 0.0, %v374
    %v376 = vpop.f32.mrb[0].mxu0
    %377 = vmatprep.mubr.f32.mxu0 0.0
    %378 = vmatmul.mubr.f32.gmra.mrb[0].mxu0 %v288
    %v379 = vpop.f32.mrb[0].mxu0
    %v380 = vadd.f32 0.0, %v379
    %v381 = vpop.f32.mrb[0].mxu0
    %382 = vmatprep.mubr.f32.mxu0 0.0
    %383 = vmatmul.mubr.f32.gmra.mrb[0].mxu0 %v291
    %v384 = vpop.f32.mrb[0].mxu0
    %v385 = vadd.f32 0.0, %v384
    %v386 = vpop.f32.mrb[0].mxu0
    %387 = vmatprep.mubr.f32.mxu0 0.0
    %388 = vmatmul.mubr.f32.gmra.mrb[0].mxu0 %v294
    %v389 = vpop.f32.mrb[0].mxu0
    %v390 = vadd.f32 0.0, %v389
    %v391 = vpop.f32.mrb[0].mxu0
    %392 = vmatprep.mubr.f32.mxu0 0.0
    %393 = vmatmul.mubr.f32.gmra.mrb[0].mxu0 %v297
    %v394 = vpop.f32.mrb[0].mxu0
    %v395 = vadd.f32 0.0, %v394
    %v396 = vpop.f32.mrb[0].mxu0
    %397 = vmatprep.mubr.f32.mxu0 0.0
    %398 = vmatmul.mubr.f32.gmra.mrb[0].mxu0 %v300
    %v399 = vpop.f32.mrb[0].mxu0
    %v400 = vadd.f32 0.0, %v399
    %v401 = vpop.f32.mrb[0].mxu0
    %402 = vmatprep.mubr.f32.mxu0 0.0
    %403 = vmatmul.mubr.f32.gmra.mrb[0].mxu0 %v303
    %v404 = vpop.f32.mrb[0].mxu0
    %v405 = vadd.f32 0.0, %v404
    %v406 = vpop.f32.mrb[0].mxu0
    %407 = vmatprep.mubr.f32.mxu0 0.0
    %408 = vmatmul.mubr.f32.gmra.mrb[0].mxu0 %v306
    %v409 = vpop.f32.mrb[0].mxu0
    %v410 = vadd.f32 0.0, %v409
    %v411 = vpop.f32.mrb[0].mxu0
    %412 = vdwg.mxu0
    %vm413 = vcmask 523264
    %v415 = vsel %vm413, %v231, 0
    %v418 = vsel %vm413, %v232, 0
    %420 = vmatprep.subr.mxu0 0.0
    %421 = vmatpush1.msra.mxu0 %v375
    %422 = vmatprep.subr.mxu0 0.0
    %423 = vmatpush1.msra.mxu0 %v380
    %424 = vmatprep.subr.mxu0 0.0
    %425 = vmatpush1.msra.mxu0 %v385
    %426 = vmatprep.subr.mxu0 0.0
    %427 = vmatpush1.msra.mxu0 %v390
    %428 = vmatprep.subr.mxu0 0.0
    %429 = vmatpush1.msra.mxu0 %v395
    %430 = vmatprep.subr.mxu0 0.0
    %431 = vmatpush1.msra.mxu0 %v400
    %432 = vmatprep.subr.mxu0 0.0
    %433 = vmatpush1.msra.mxu0 %v405
    %434 = vmatprep.subr.mxu0 0.0
    %435 = vmatpush1.msra.mxu0 %v410
    %436 = vmatprep.subr.mxu0 0.0
    %437 = vmatpush1.msra.mxu0 0.0
    %438 = vmatprep.subr.mxu0 0.0
    %439 = vmatpush1.msra.mxu0 0.0
    %440 = vmatprep.subr.mxu0 0.0
    %441 = vmatpush1.msra.mxu0 0.0
    %442 = vmatprep.subr.mxu0 0.0
    %443 = vmatpush1.msra.mxu0 0.0
    %444 = vmatprep.subr.mxu0 0.0
    %445 = vmatpush1.msra.mxu0 0.0
    %446 = vmatprep.subr.mxu0 0.0
    %447 = vmatpush1.msra.mxu0 0.0
    %448 = vmatprep.subr.mxu0 0.0
    %449 = vmatpush1.msra.mxu0 0.0
    %450 = vmatprep.subr.mxu0 0.0
    %451 = vmatpush1.msra.mxu0 0.0
    %452 = vmatprep.subr.mxu0 0.0
    %453 = vmatpush1.msra.mxu0 0.0
    %454 = vmatprep.subr.mxu0 0.0
    %455 = vmatpush1.msra.mxu0 0.0
    %456 = vmatprep.subr.mxu0 0.0
    %457 = vmatpush1.msra.mxu0 0.0
    %458 = vmatprep.subr.mxu0 0.0
    %459 = vmatpush1.msra.mxu0 0.0
    %460 = vmatprep.subr.mxu0 0.0
    %461 = vmatpush1.msra.mxu0 0.0
    %462 = vmatprep.subr.mxu0 0.0
    %463 = vmatpush1.msra.mxu0 0.0
    %464 = vmatprep.subr.mxu0 0.0
    %465 = vmatpush1.msra.mxu0 0.0
    %466 = vmatprep.subr.mxu0 0.0
    %467 = vmatpush1.msra.mxu0 0.0
    %468 = vmatprep.subr.mxu0 0.0
    %469 = vmatpush1.msra.mxu0 0.0
    %470 = vmatprep.subr.mxu0 0.0
    %471 = vmatpush1.msra.mxu0 0.0
    %472 = vmatprep.subr.mxu0 0.0
    %473 = vmatpush1.msra.mxu0 0.0
    %474 = vmatprep.subr.mxu0 0.0
    %475 = vmatpush1.msra.mxu0 0.0
    %476 = vmatprep.subr.mxu0 0.0
    %477 = vmatpush1.msra.mxu0 0.0
    %478 = vmatprep.subr.mxu0 0.0
    %479 = vmatpush1.msra.mxu0 0.0
    %480 = vmatprep.subr.mxu0 0.0
    %481 = vmatpush1.msra.mxu0 0.0
    %482 = vmatprep.subr.mxu0 0.0
    %483 = vmatpush1.msra.mxu0 0.0
    %484 = vmatprep.mubr.f32.mxu0 0.0
    %485 = vmatmul.mubr.f32.gmra.mrb[0].mxu0 %v415
    %v486 = vpop.f32.mrb[0].mxu0
    %v487 = vadd.f32 0.0, %v486
    %v488 = vpop.f32.mrb[0].mxu0
    %489 = vmatprep.mubr.f32.mxu0 0.0
    %490 = vmatmul.mubr.f32.gmra.mrb[0].mxu0 %v418
    %v491 = vpop.f32.mrb[0].mxu0
    %v492 = vadd.f32 0.0, %v491
    %v493 = vpop.f32.mrb[0].mxu0
    %494 = vdwg.mxu0
    %v495 = vlaneseq
    %v496 = vshrl.u32 %v495, 7
    %v497 = vsub.s32 1, %v496
    %v498 = vrot.slane %v120, %v497
    %v500 = vsel %vm125, %v487, 0
    %v503 = vsel %vm125, %v492, 0
    %505 = vmatprep.subr.mxu0 0.0
    %506 = vmatpush1.msra.mxu0 %v104
    %507 = vmatprep.subr.mxu0 0.0
    %508 = vmatpush1.msra.mxu0 %v105
    %509 = vmatprep.subr.mxu0 0.0
    %510 = vmatpush1.msra.mxu0 %v106
    %511 = vmatprep.subr.mxu0 0.0
    %512 = vmatpush1.msra.mxu0 %v107
    %513 = vmatprep.subr.mxu0 0.0
    %514 = vmatpush1.msra.mxu0 0.0
    %515 = vmatprep.subr.mxu0 0.0
    %516 = vmatpush1.msra.mxu0 0.0
    %517 = vmatprep.subr.mxu0 0.0
    %518 = vmatpush1.msra.mxu0 0.0
    %519 = vmatprep.subr.mxu0 0.0
    %520 = vmatpush1.msra.mxu0 0.0
    %521 = vmatprep.subr.mxu0 0.0
    %522 = vmatpush1.msra.mxu0 0.0
    %523 = vmatprep.subr.mxu0 0.0
    %524 = vmatpush1.msra.mxu0 0.0
    %525 = vmatprep.subr.mxu0 0.0
    %526 = vmatpush1.msra.mxu0 0.0
    %527 = vmatprep.subr.mxu0 0.0
    %528 = vmatpush1.msra.mxu0 0.0
    %529 = vmatprep.subr.mxu0 0.0
    %530 = vmatpush1.msra.mxu0 0.0
    %531 = vmatprep.subr.mxu0 0.0
    %532 = vmatpush1.msra.mxu0 0.0
    %533 = vmatprep.subr.mxu0 0.0
    %534 = vmatpush1.msra.mxu0 0.0
    %535 = vmatprep.subr.mxu0 0.0
    %536 = vmatpush1.msra.mxu0 0.0
    %537 = vmatprep.subr.mxu0 0.0
    %538 = vmatpush1.msra.mxu0 0.0
    %539 = vmatprep.subr.mxu0 0.0
    %540 = vmatpush1.msra.mxu0 0.0
    %541 = vmatprep.subr.mxu0 0.0
    %542 = vmatpush1.msra.mxu0 0.0
    %543 = vmatprep.subr.mxu0 0.0
    %544 = vmatpush1.msra.mxu0 0.0
    %545 = vmatprep.subr.mxu0 0.0
    %546 = vmatpush1.msra.mxu0 0.0
    %547 = vmatprep.subr.mxu0 0.0
    %548 = vmatpush1.msra.mxu0 0.0
    %549 = vmatprep.subr.mxu0 0.0
    %550 = vmatpush1.msra.mxu0 0.0
    %551 = vmatprep.subr.mxu0 0.0
    %552 = vmatpush1.msra.mxu0 0.0
    %553 = vmatprep.subr.mxu0 0.0
    %554 = vmatpush1.msra.mxu0 0.0
    %555 = vmatprep.subr.mxu0 0.0
    %556 = vmatpush1.msra.mxu0 0.0
    %557 = vmatprep.subr.mxu0 0.0
    %558 = vmatpush1.msra.mxu0 0.0
    %559 = vmatprep.subr.mxu0 0.0
    %560 = vmatpush1.msra.mxu0 0.0
    %561 = vmatprep.subr.mxu0 0.0
    %562 = vmatpush1.msra.mxu0 0.0
    %563 = vmatprep.subr.mxu0 0.0
    %564 = vmatpush1.msra.mxu0 0.0
    %565 = vmatprep.subr.mxu0 0.0
    %566 = vmatpush1.msra.mxu0 0.0
    %567 = vmatprep.subr.mxu0 0.0
    %568 = vmatpush1.msra.mxu0 0.0
    %569 = vmatprep.mubr.f32.mxu0 0.0
    %570 = vmatmul.mubr.f32.gmra.mrb[0].mxu0 %v500
    %v571 = vpop.f32.mrb[0].mxu0
    %v572 = vadd.f32 %v498, %v571
    %v573 = vpop.f32.mrb[0].mxu0
    %574 = vmatprep.mubr.f32.mxu0 0.0
    %575 = vmatmul.mubr.f32.gmra.mrb[0].mxu0 %v503
    %v576 = vpop.f32.mrb[0].mxu0
    %v577 = vadd.f32 %v498, %v576
    %v578 = vpop.f32.mrb[0].mxu0
    %579 = vdwg.mxu0
    %v580 = vadd.f32 %v59, %v572
    %v581 = vadd.f32 %v60, %v577
    %v582 = vsel %vm125, %v580, 0.0
    %583 = vadd.xlane.f32.xlu0 %v582
    %v584 = vpop.xlane.xlu0 %583
    %v585 = vsel %vm125, %v581, 0.0
    %586 = vadd.xlane.f32.xlu0 %v585
    %v587 = vpop.xlane.xlu0 %586
    %v588 = vrcp.pop 32.0
    %v589 = vmul.f32 %v584, %v588
    %v590 = vmul.f32 %v587, %v588
    %v591 = vmul.f32 %v580, %v580
    %v592 = vmul.f32 %v581, %v581
    %v593 = vsel %vm125, %v591, 0.0
    %594 = vadd.xlane.f32.xlu0 %v593
    %v595 = vpop.xlane.xlu0 %594
    %v596 = vsel %vm125, %v592, 0.0
    %597 = vadd.xlane.f32.xlu0 %v596
    %v598 = vpop.xlane.xlu0 %597
    %v599 = vmul.f32 %v595, %v588
    %v600 = vmul.f32 %v598, %v588
    %v601 = vmul.f32 %v589, %v589
    %v602 = vmul.f32 %v590, %v590
    %v603 = vsub.f32 %v599, %v601
    %v604 = vsub.f32 %v600, %v602
    %v605 = vsub.f32 %v580, %v589
    %v606 = vsub.f32 %v581, %v590
    %v607 = vadd.f32 %v603, 1e-05
    %v608 = vadd.f32 %v604, 1e-05
    %v609 = vrsqrt.pop %v607
    %v610 = vrsqrt.pop %v608
    %v611 = vmul.f32 %v605, %v609
    %v612 = vmul.f32 %v606, %v610
    %v613 = vlaneseq
    %v614 = vshrl.u32 %v613, 7
    %v615 = vsub.s32 4, %v614
    %v616 = vrot.slane %v120, %v615
    %v617 = vmul.f32 %v611, %v616
    %v618 = vmul.f32 %v612, %v616
    %v619 = vlaneseq
    %v620 = vshrl.u32 %v619, 7
    %v621 = vsub.s32 5, %v620
    %v622 = vrot.slane %v120, %v621
    %v623 = vadd.f32 %v617, %v622
    %v624 = vadd.f32 %v618, %v622
    %v625 = vlaneseq
    %v626 = vshrl.u32 %v625, 7
    %v627 = vsub.s32 2, %v626
    %v628 = vrot.slane %v120, %v627
    %v630 = vsel %vm125, %v623, 0
    %v633 = vsel %vm125, %v624, 0
    %635 = vmatprep.subr.mxu0 0.0
    %636 = vmatpush1.msra.mxu0 %v108
    %637 = vmatprep.subr.mxu0 0.0
    %638 = vmatpush1.msra.mxu0 %v109
    %639 = vmatprep.subr.mxu0 0.0
    %640 = vmatpush1.msra.mxu0 %v110
    %641 = vmatprep.subr.mxu0 0.0
    %642 = vmatpush1.msra.mxu0 %v111
    %643 = vmatprep.subr.mxu0 0.0
    %644 = vmatpush1.msra.mxu0 0.0
    %645 = vmatprep.subr.mxu0 0.0
    %646 = vmatpush1.msra.mxu0 0.0
    %647 = vmatprep.subr.mxu0 0.0
    %648 = vmatpush1.msra.mxu0 0.0
    %649 = vmatprep.subr.mxu0 0.0
    %650 = vmatpush1.msra.mxu0 0.0
    %651 = vmatprep.subr.mxu0 0.0
    %652 = vmatpush1.msra.mxu0 0.0
    %653 = vmatprep.subr.mxu0 0.0
    %654 = vmatpush1.msra.mxu0 0.0
    %655 = vmatprep.subr.mxu0 0.0
    %656 = vmatpush1.msra.mxu0 0.0
    %657 = vmatprep.subr.mxu0 0.0
    %658 = vmatpush1.msra.mxu0 0.0
    %659 = vmatprep.subr.mxu0 0.0
    %660 = vmatpush1.msra.mxu0 0.0
    %661 = vmatprep.subr.mxu0 0.0
    %662 = vmatpush1.msra.mxu0 0.0
    %663 = vmatprep.subr.mxu0 0.0
    %664 = vmatpush1.msra.mxu0 0.0
    %665 = vmatprep.subr.mxu0 0.0
    %666 = vmatpush1.msra.mxu0 0.0
    %667 = vmatprep.subr.mxu0 0.0
    %668 = vmatpush1.msra.mxu0 0.0
    %669 = vmatprep.subr.mxu0 0.0
    %670 = vmatpush1.msra.mxu0 0.0
    %671 = vmatprep.subr.mxu0 0.0
    %672 = vmatpush1.msra.mxu0 0.0
    %673 = vmatprep.subr.mxu0 0.0
    %674 = vmatpush1.msra.mxu0 0.0
    %675 = vmatprep.subr.mxu0 0.0
    %676 = vmatpush1.msra.mxu0 0.0
    %677 = vmatprep.subr.mxu0 0.0
    %678 = vmatpush1.msra.mxu0 0.0
    %679 = vmatprep.subr.mxu0 0.0
    %680 = vmatpush1.msra.mxu0 0.0
    %681 = vmatprep.subr.mxu0 0.0
    %682 = vmatpush1.msra.mxu0 0.0
    %683 = vmatprep.subr.mxu0 0.0
    %684 = vmatpush1.msra.mxu0 0.0
    %685 = vmatprep.subr.mxu0 0.0
    %686 = vmatpush1.msra.mxu0 0.0
    %687 = vmatprep.subr.mxu0 0.0
    %688 = vmatpush1.msra.mxu0 0.0
    %689 = vmatprep.subr.mxu0 0.0
    %690 = vmatpush1.msra.mxu0 0.0
    %691 = vmatprep.subr.mxu0 0.0
    %692 = vmatpush1.msra.mxu0 0.0
    %693 = vmatprep.subr.mxu0 0.0
    %694 = vmatpush1.msra.mxu0 0.0
    %695 = vmatprep.subr.mxu0 0.0
    %696 = vmatpush1.msra.mxu0 0.0
    %697 = vmatprep.subr.mxu0 0.0
    %698 = vmatpush1.msra.mxu0 0.0
    %699 = vmatprep.mubr.f32.mxu0 0.0
    %700 = vmatmul.mubr.f32.gmra.mrb[0].mxu0 %v630
    %v701 = vpop.f32.mrb[0].mxu0
    %v702 = vadd.f32 %v628, %v701
    %v703 = vpop.f32.mrb[0].mxu0
    %704 = vmatprep.mubr.f32.mxu0 0.0
    %705 = vmatmul.mubr.f32.gmra.mrb[0].mxu0 %v633
    %v706 = vpop.f32.mrb[0].mxu0
    %v707 = vadd.f32 %v628, %v706
    %v708 = vpop.f32.mrb[0].mxu0
    %709 = vdwg.mxu0
    %v710 = vmax.f32 %v702, 0.0
    %v711 = vmax.f32 %v707, 0.0
    %v712 = vlaneseq
    %v713 = vshrl.u32 %v712, 7
    %v714 = vsub.s32 3, %v713
    %v715 = vrot.slane %v120, %v714
    %v717 = vsel %vm413, %v710, 0
    %v720 = vsel %vm413, %v711, 0
    %722 = vmatprep.subr.mxu0 0.0
    %723 = vmatpush1.msra.mxu0 %v112
    %724 = vmatprep.subr.mxu0 0.0
    %725 = vmatpush1.msra.mxu0 %v113
    %726 = vmatprep.subr.mxu0 0.0
    %727 = vmatpush1.msra.mxu0 %v114
    %728 = vmatprep.subr.mxu0 0.0
    %729 = vmatpush1.msra.mxu0 %v115
    %730 = vmatprep.subr.mxu0 0.0
    %731 = vmatpush1.msra.mxu0 %v116
    %732 = vmatprep.subr.mxu0 0.0
    %733 = vmatpush1.msra.mxu0 %v117
    %734 = vmatprep.subr.mxu0 0.0
    %735 = vmatpush1.msra.mxu0 %v118
    %736 = vmatprep.subr.mxu0 0.0
    %737 = vmatpush1.msra.mxu0 %v119
    %738 = vmatprep.subr.mxu0 0.0
    %739 = vmatpush1.msra.mxu0 0.0
    %740 = vmatprep.subr.mxu0 0.0
    %741 = vmatpush1.msra.mxu0 0.0
    %742 = vmatprep.subr.mxu0 0.0
    %743 = vmatpush1.msra.mxu0 0.0
    %744 = vmatprep.subr.mxu0 0.0
    %745 = vmatpush1.msra.mxu0 0.0
    %746 = vmatprep.subr.mxu0 0.0
    %747 = vmatpush1.msra.mxu0 0.0
    %748 = vmatprep.subr.mxu0 0.0
    %749 = vmatpush1.msra.mxu0 0.0
    %750 = vmatprep.subr.mxu0 0.0
    %751 = vmatpush1.msra.mxu0 0.0
    %752 = vmatprep.subr.mxu0 0.0
    %753 = vmatpush1.msra.mxu0 0.0
    %754 = vmatprep.subr.mxu0 0.0
    %755 = vmatpush1.msra.mxu0 0.0
    %756 = vmatprep.subr.mxu0 0.0
    %757 = vmatpush1.msra.mxu0 0.0
    %758 = vmatprep.subr.mxu0 0.0
    %759 = vmatpush1.msra.mxu0 0.0
    %760 = vmatprep.subr.mxu0 0.0
    %761 = vmatpush1.msra.mxu0 0.0
    %762 = vmatprep.subr.mxu0 0.0
    %763 = vmatpush1.msra.mxu0 0.0
    %764 = vmatprep.subr.mxu0 0.0
    %765 = vmatpush1.msra.mxu0 0.0
    %766 = vmatprep.subr.mxu0 0.0
    %767 = vmatpush1.msra.mxu0 0.0
    %768 = vmatprep.subr.mxu0 0.0
    %769 = vmatpush1.msra.mxu0 0.0
    %770 = vmatprep.subr.mxu0 0.0
    %771 = vmatpush1.msra.mxu0 0.0
    %772 = vmatprep.subr.mxu0 0.0
    %773 = vmatpush1.msra.mxu0 0.0
    %774 = vmatprep.subr.mxu0 0.0
    %775 = vmatpush1.msra.mxu0 0.0
    %776 = vmatprep.subr.mxu0 0.0
    %777 = vmatpush1.msra.mxu0 0.0
    %778 = vmatprep.subr.mxu0 0.0
    %779 = vmatpush1.msra.mxu0 0.0
    %780 = vmatprep.subr.mxu0 0.0
    %781 = vmatpush1.msra.mxu0 0.0
    %782 = vmatprep.subr.mxu0 0.0
    %783 = vmatpush1.msra.mxu0 0.0
    %784 = vmatprep.subr.mxu0 0.0
    %785 = vmatpush1.msra.mxu0 0.0
    %786 = vmatprep.mubr.f32.mxu0 0.0
    %787 = vmatmul.mubr.f32.gmra.mrb[0].mxu0 %v717
    %v788 = vpop.f32.mrb[0].mxu0
    %v789 = vadd.f32 %v715, %v788
    %v790 = vpop.f32.mrb[0].mxu0
    %791 = vmatprep.mubr.f32.mxu0 0.0
    %792 = vmatmul.mubr.f32.gmra.mrb[0].mxu0 %v720
    %v793 = vpop.f32.mrb[0].mxu0
    %v794 = vadd.f32 %v715, %v793
    %v795 = vpop.f32.mrb[0].mxu0
    %796 = vdwg.mxu0
    %v797 = vadd.f32 %v623, %v789
    %v798 = vadd.f32 %v624, %v794
    %v799 = vsel %vm125, %v797, 0.0
    %800 = vadd.xlane.f32.xlu0 %v799
    %v801 = vpop.xlane.xlu0 %800
    %v802 = vsel %vm125, %v798, 0.0
    %803 = vadd.xlane.f32.xlu0 %v802
    %v804 = vpop.xlane.xlu0 %803
    %v805 = vmul.f32 %v801, %v588
    %v806 = vmul.f32 %v804, %v588
    %v807 = vmul.f32 %v797, %v797
    %v808 = vmul.f32 %v798, %v798
    %v809 = vsel %vm125, %v807, 0.0
    %810 = vadd.xlane.f32.xlu0 %v809
    %v811 = vpop.xlane.xlu0 %810
    %v812 = vsel %vm125, %v808, 0.0
    %813 = vadd.xlane.f32.xlu0 %v812
    %v814 = vpop.xlane.xlu0 %813
    %v815 = vmul.f32 %v811, %v588
    %v816 = vmul.f32 %v814, %v588
    %v817 = vmul.f32 %v805, %v805
    %v818 = vmul.f32 %v806, %v806
    %v819 = vsub.f32 %v815, %v817
    %v820 = vsub.f32 %v816, %v818
    %v821 = vsub.f32 %v797, %v805
    %v822 = vsub.f32 %v798, %v806
    %v823 = vadd.f32 %v819, 1e-05
    %v824 = vadd.f32 %v820, 1e-05
    %v825 = vrsqrt.pop %v823
    %v826 = vrsqrt.pop %v824
    %v827 = vmul.f32 %v821, %v825
    %v828 = vmul.f32 %v822, %v826
    %v829 = vlaneseq
    %v830 = vshrl.u32 %v829, 7
    %v831 = vsub.s32 6, %v830
    %v832 = vrot.slane %v120, %v831
    %v833 = vmul.f32 %v827, %v832
    %v834 = vmul.f32 %v828, %v832
    %v835 = vlaneseq
    %v836 = vshrl.u32 %v835, 7
    %v837 = vsub.s32 7, %v836
    %v838 = vrot.slane %v120, %v837
    %v839 = vadd.f32 %v833, %v838
    %v840 = vadd.f32 %v834, %v838
    %s841 = scalar_lea.vmem %s2, 32
    %v842 = vld [vmem:[%s841] sm:$0xff]
    %v843 = vld [vmem:[%s841 + $0x8] sm:$0xff]
    %v844 = vld [vmem:[%s841 + $0x10] sm:$0xff]
    %v845 = vld [vmem:[%s841 + $0x18] sm:$0xff]
    %s846 = scalar_lea.vmem %s3, 32
    %v847 = vld [vmem:[%s846] sm:$0xff]
    %v848 = vld [vmem:[%s846 + $0x8] sm:$0xff]
    %v849 = vld [vmem:[%s846 + $0x10] sm:$0xff]
    %v850 = vld [vmem:[%s846 + $0x18] sm:$0xff]
    %s851 = scalar_lea.vmem %s4, 32
    %v852 = vld [vmem:[%s851] sm:$0xff]
    %v853 = vld [vmem:[%s851 + $0x8] sm:$0xff]
    %v854 = vld [vmem:[%s851 + $0x10] sm:$0xff]
    %v855 = vld [vmem:[%s851 + $0x18] sm:$0xff]
    %s856 = scalar_lea.vmem %s5, 64
    %v857 = vld [vmem:[%s856] sm:$0xff]
    %v858 = vld [vmem:[%s856 + $0x8] sm:$0xff]
    %v859 = vld [vmem:[%s856 + $0x10] sm:$0xff]
    %v860 = vld [vmem:[%s856 + $0x18] sm:$0xff]
    %v861 = vld [vmem:[%s856 + $0x20] sm:$0xff]
    %v862 = vld [vmem:[%s856 + $0x28] sm:$0xff]
    %v863 = vld [vmem:[%s856 + $0x30] sm:$0xff]
    %v864 = vld [vmem:[%s856 + $0x38] sm:$0xff]
    %s865 = scalar_lea.vmem %s6, 8
    %v866 = vld [vmem:[%s865] sm:$0xff]
    %v867 = vlaneseq
    %v868 = vshrl.u32 %v867, 7
    %v869 = vsub.s32 0, %v868
    %v870 = vrot.slane %v866, %v869
    %v872 = vsel %vm125, %v839, 0
    %v875 = vsel %vm125, %v840, 0
    %877 = vmatprep.subr.mxu0 0.0
    %878 = vmatpush1.msra.mxu0 %v842
    %879 = vmatprep.subr.mxu0 0.0
    %880 = vmatpush1.msra.mxu0 %v843
    %881 = vmatprep.subr.mxu0 0.0
    %882 = vmatpush1.msra.mxu0 %v844
    %883 = vmatprep.subr.mxu0 0.0
    %884 = vmatpush1.msra.mxu0 %v845
    %885 = vmatprep.subr.mxu0 0.0
    %886 = vmatpush1.msra.mxu0 0.0
    %887 = vmatprep.subr.mxu0 0.0
    %888 = vmatpush1.msra.mxu0 0.0
    %889 = vmatprep.subr.mxu0 0.0
    %890 = vmatpush1.msra.mxu0 0.0
    %891 = vmatprep.subr.mxu0 0.0
    %892 = vmatpush1.msra.mxu0 0.0
    %893 = vmatprep.subr.mxu0 0.0
    %894 = vmatpush1.msra.mxu0 0.0
    %895 = vmatprep.subr.mxu0 0.0
    %896 = vmatpush1.msra.mxu0 0.0
    %897 = vmatprep.subr.mxu0 0.0
    %898 = vmatpush1.msra.mxu0 0.0
    %899 = vmatprep.subr.mxu0 0.0
    %900 = vmatpush1.msra.mxu0 0.0
    %901 = vmatprep.subr.mxu0 0.0
    %902 = vmatpush1.msra.mxu0 0.0
    %903 = vmatprep.subr.mxu0 0.0
    %904 = vmatpush1.msra.mxu0 0.0
    %905 = vmatprep.subr.mxu0 0.0
    %906 = vmatpush1.msra.mxu0 0.0
    %907 = vmatprep.subr.mxu0 0.0
    %908 = vmatpush1.msra.mxu0 0.0
    %909 = vmatprep.subr.mxu0 0.0
    %910 = vmatpush1.msra.mxu0 0.0
    %911 = vmatprep.subr.mxu0 0.0
    %912 = vmatpush1.msra.mxu0 0.0
    %913 = vmatprep.subr.mxu0 0.0
    %914 = vmatpush1.msra.mxu0 0.0
    %915 = vmatprep.subr.mxu0 0.0
    %916 = vmatpush1.msra.mxu0 0.0
    %917 = vmatprep.subr.mxu0 0.0
    %918 = vmatpush1.msra.mxu0 0.0
    %919 = vmatprep.subr.mxu0 0.0
    %920 = vmatpush1.msra.mxu0 0.0
    %921 = vmatprep.subr.mxu0 0.0
    %922 = vmatpush1.msra.mxu0 0.0
    %923 = vmatprep.subr.mxu0 0.0
    %924 = vmatpush1.msra.mxu0 0.0
    %925 = vmatprep.subr.mxu0 0.0
    %926 = vmatpush1.msra.mxu0 0.0
    %927 = vmatprep.subr.mxu0 0.0
    %928 = vmatpush1.msra.mxu0 0.0
    %929 = vmatprep.subr.mxu0 0.0
    %930 = vmatpush1.msra.mxu0 0.0
    %931 = vmatprep.subr.mxu0 0.0
    %932 = vmatpush1.msra.mxu0 0.0
    %933 = vmatprep.subr.mxu0 0.0
    %934 = vmatpush1.msra.mxu0 0.0
    %935 = vmatprep.subr.mxu0 0.0
    %936 = vmatpush1.msra.mxu0 0.0
    %937 = vmatprep.subr.mxu0 0.0
    %938 = vmatpush1.msra.mxu0 0.0
    %939 = vmatprep.subr.mxu0 0.0
    %940 = vmatpush1.msra.mxu0 0.0
    %941 = vmatprep.mubr.f32.mxu0 0.0
    %942 = vmatmul.mubr.f32.gmra.mrb[0].mxu0 %v872
    %v943 = vpop.f32.mrb[0].mxu0
    %v944 = vadd.f32 %v870, %v943
    %v945 = vpop.f32.mrb[0].mxu0
    %946 = vmatprep.mubr.f32.mxu0 0.0
    %947 = vmatmul.mubr.f32.gmra.mrb[0].mxu0 %v875
    %v948 = vpop.f32.mrb[0].mxu0
    %v949 = vadd.f32 %v870, %v948
    %v950 = vpop.f32.mrb[0].mxu0
    %951 = vdwg.mxu0
    %vm952 = vcmp.gt.f32.partialorder %v944, 0.0
    %vm953 = vcmp.gt.f32.partialorder %v949, 0.0
    %v954 = vadd.f32 %v944, 1.0
    %v955 = vadd.f32 %v949, 1.0
    %v956 = vmin.f32 %v944, 0.0
    %v957 = vmin.f32 %v949, 0.0
    %v958 = vmul.f32 %v956, 1.442695
    %v959 = vpow.pop %v958
    %v960 = vmul.f32 %v957, 1.442695
    %v961 = vpow.pop %v960
    %v962 = vsel %vm952, %v954, %v959
    %v963 = vsel %vm953, %v955, %v961
    %v964 = vmul.f32 %v962, %v92
    %v965 = vmul.f32 %v963, %v93
    %v966 = vmul.f32 %v962, %v98
    %v967 = vmul.f32 %v963, %v99
    %970 = vrot.lane.b32.xlu0 %v966, 32
    %v971 = vpop.permute.xlu0 %970
    %972 = vrot.lane.b32.xlu0 %v967, 32
    %v973 = vpop.permute.xlu0 %972
    %v976 = vsel %vm125, %v964, %v971
    %v977 = vsel %vm125, %v965, %v973
    %980 = vrot.lane.b32.xlu0 %v964, 96
    %v981 = vpop.permute.xlu0 %980
    %982 = vrot.lane.b32.xlu0 %v965, 96
    %v983 = vpop.permute.xlu0 %982
    %v986 = vsel %vm125, %v981, %v966
    %v987 = vsel %vm125, %v983, %v967
    %988 = vxpose.xlu0.b32.start [1/16] %v986, 128
    %989 = vxpose.xlu0.b32.cont [2/16] %v987, 128
    %990 = vxpose.xlu0.b32.cont [3/16] 0.0, 128
    %991 = vxpose.xlu0.b32.cont [4/16] 0.0, 128
    %992 = vxpose.xlu0.b32.cont [5/16] 0.0, 128
    %993 = vxpose.xlu0.b32.cont [6/16] 0.0, 128
    %994 = vxpose.xlu0.b32.cont [7/16] 0.0, 128
    %995 = vxpose.xlu0.b32.cont [8/16] 0.0, 128
    %996 = vxpose.xlu0.b32.cont [9/16] 0.0, 128
    %997 = vxpose.xlu0.b32.cont [10/16] 0.0, 128
    %998 = vxpose.xlu0.b32.cont [11/16] 0.0, 128
    %999 = vxpose.xlu0.b32.cont [12/16] 0.0, 128
    %1000 = vxpose.xlu0.b32.cont [13/16] 0.0, 128
    %1001 = vxpose.xlu0.b32.cont [14/16] 0.0, 128
    %1002 = vxpose.xlu0.b32.cont [15/16] 0.0, 128
    %1003 = vxpose.xlu0.b32.end [16/16] 0.0, 128
    %v1004 = vpop.trf.xlu0
    %v1005 = vpop.trf.xlu0
    %v1006 = vpop.trf.xlu0
    %v1007 = vpop.trf.xlu0
    %v1008 = vpop.trf.xlu0
    %v1009 = vpop.trf.xlu0
    %v1010 = vpop.trf.xlu0
    %v1011 = vpop.trf.xlu0
    %v1012 = vpop.trf.xlu0
    %v1013 = vpop.trf.xlu0
    %v1014 = vpop.trf.xlu0
    %v1015 = vpop.trf.xlu0
    %v1016 = vpop.trf.xlu0
    %v1017 = vpop.trf.xlu0
    %v1018 = vpop.trf.xlu0
    %v1019 = vpop.trf.xlu0
    %1022 = vrot.lane.b32.xlu0 %v944, 64
    %v1023 = vpop.permute.xlu0 %1022
    %1024 = vrot.lane.b32.xlu0 %v949, 64
    %v1025 = vpop.permute.xlu0 %1024
    %v1029 = vsel %vm283, %v1004, 0
    %v1032 = vsel %vm283, %v1005, 0
    %v1035 = vsel %vm283, %v1006, 0
    %v1038 = vsel %vm283, %v1007, 0
    %v1041 = vsel %vm283, %v1008, 0
    %v1044 = vsel %vm283, %v1009, 0
    %v1047 = vsel %vm283, %v1010, 0
    %v1050 = vsel %vm283, %v1011, 0
    %1052 = vmatprep.subr.mxu0 0.0
    %1053 = vmatpush1.msra.mxu0 %v1023
    %1054 = vmatprep.subr.mxu0 0.0
    %1055 = vmatpush1.msra.mxu0 %v1025
    %1056 = vmatprep.subr.mxu0 0.0
    %1057 = vmatpush1.msra.mxu0 0.0
    %1058 = vmatprep.subr.mxu0 0.0
    %1059 = vmatpush1.msra.mxu0 0.0
    %1060 = vmatprep.subr.mxu0 0.0
    %1061 = vmatpush1.msra.mxu0 0.0
    %1062 = vmatprep.subr.mxu0 0.0
    %1063 = vmatpush1.msra.mxu0 0.0
    %1064 = vmatprep.subr.mxu0 0.0
    %1065 = vmatpush1.msra.mxu0 0.0
    %1066 = vmatprep.subr.mxu0 0.0
    %1067 = vmatpush1.msra.mxu0 0.0
    %1068 = vmatprep.subr.mxu0 0.0
    %1069 = vmatpush1.msra.mxu0 0.0
    %1070 = vmatprep.subr.mxu0 0.0
    %1071 = vmatpush1.msra.mxu0 0.0
    %1072 = vmatprep.subr.mxu0 0.0
    %1073 = vmatpush1.msra.mxu0 0.0
    %1074 = vmatprep.subr.mxu0 0.0
    %1075 = vmatpush1.msra.mxu0 0.0
    %1076 = vmatprep.subr.mxu0 0.0
    %1077 = vmatpush1.msra.mxu0 0.0
    %1078 = vmatprep.subr.mxu0 0.0
    %1079 = vmatpush1.msra.mxu0 0.0
    %1080 = vmatprep.subr.mxu0 0.0
    %1081 = vmatpush1.msra.mxu0 0.0
    %1082 = vmatprep.subr.mxu0 0.0
    %1083 = vmatpush1.msra.mxu0 0.0
    %1084 = vmatprep.subr.mxu0 0.0
    %1085 = vmatpush1.msra.mxu0 0.0
    %1086 = vmatprep.subr.mxu0 0.0
    %1087 = vmatpush1.msra.mxu0 0.0
    %1088 = vmatprep.subr.mxu0 0.0
    %1089 = vmatpush1.msra.mxu0 0.0
    %1090 = vmatprep.subr.mxu0 0.0
    %1091 = vmatpush1.msra.mxu0 0.0
    %1092 = vmatprep.subr.mxu0 0.0
    %1093 = vmatpush1.msra.mxu0 0.0
    %1094 = vmatprep.subr.mxu0 0.0
    %1095 = vmatpush1.msra.mxu0 0.0
    %1096 = vmatprep.subr.mxu0 0.0
    %1097 = vmatpush1.msra.mxu0 0.0
    %1098 = vmatprep.subr.mxu0 0.0
    %1099 = vmatpush1.msra.mxu0 0.0
    %1100 = vmatprep.subr.mxu0 0.0
    %1101 = vmatpush1.msra.mxu0 0.0
    %1102 = vmatprep.subr.mxu0 0.0
    %1103 = vmatpush1.msra.mxu0 0.0
    %1104 = vmatprep.subr.mxu0 0.0
    %1105 = vmatpush1.msra.mxu0 0.0
    %1106 = vmatprep.subr.mxu0 0.0
    %1107 = vmatpush1.msra.mxu0 0.0
    %1108 = vmatprep.subr.mxu0 0.0
    %1109 = vmatpush1.msra.mxu0 0.0
    %1110 = vmatprep.subr.mxu0 0.0
    %1111 = vmatpush1.msra.mxu0 0.0
    %1112 = vmatprep.subr.mxu0 0.0
    %1113 = vmatpush1.msra.mxu0 0.0
    %1114 = vmatprep.subr.mxu0 0.0
    %1115 = vmatpush1.msra.mxu0 0.0
    %1116 = vmatprep.mubr.f32.mxu0 0.0
    %1117 = vmatmul.mubr.f32.gmra.mrb[0].mxu0 %v1029
    %v1118 = vpop.f32.mrb[0].mxu0
    %v1119 = vadd.f32 0.0, %v1118
    %v1120 = vpop.f32.mrb[0].mxu0
    %1121 = vmatprep.mubr.f32.mxu0 0.0
    %1122 = vmatmul.mubr.f32.gmra.mrb[0].mxu0 %v1032
    %v1123 = vpop.f32.mrb[0].mxu0
    %v1124 = vadd.f32 0.0, %v1123
    %v1125 = vpop.f32.mrb[0].mxu0
    %1126 = vmatprep.mubr.f32.mxu0 0.0
    %1127 = vmatmul.mubr.f32.gmra.mrb[0].mxu0 %v1035
    %v1128 = vpop.f32.mrb[0].mxu0
    %v1129 = vadd.f32 0.0, %v1128
    %v1130 = vpop.f32.mrb[0].mxu0
    %1131 = vmatprep.mubr.f32.mxu0 0.0
    %1132 = vmatmul.mubr.f32.gmra.mrb[0].mxu0 %v1038
    %v1133 = vpop.f32.mrb[0].mxu0
    %v1134 = vadd.f32 0.0, %v1133
    %v1135 = vpop.f32.mrb[0].mxu0
    %1136 = vmatprep.mubr.f32.mxu0 0.0
    %1137 = vmatmul.mubr.f32.gmra.mrb[0].mxu0 %v1041
    %v1138 = vpop.f32.mrb[0].mxu0
    %v1139 = vadd.f32 0.0, %v1138
    %v1140 = vpop.f32.mrb[0].mxu0
    %1141 = vmatprep.mubr.f32.mxu0 0.0
    %1142 = vmatmul.mubr.f32.gmra.mrb[0].mxu0 %v1044
    %v1143 = vpop.f32.mrb[0].mxu0
    %v1144 = vadd.f32 0.0, %v1143
    %v1145 = vpop.f32.mrb[0].mxu0
    %1146 = vmatprep.mubr.f32.mxu0 0.0
    %1147 = vmatmul.mubr.f32.gmra.mrb[0].mxu0 %v1047
    %v1148 = vpop.f32.mrb[0].mxu0
    %v1149 = vadd.f32 0.0, %v1148
    %v1150 = vpop.f32.mrb[0].mxu0
    %1151 = vmatprep.mubr.f32.mxu0 0.0
    %1152 = vmatmul.mubr.f32.gmra.mrb[0].mxu0 %v1050
    %v1153 = vpop.f32.mrb[0].mxu0
    %v1154 = vadd.f32 0.0, %v1153
    %v1155 = vpop.f32.mrb[0].mxu0
    %1156 = vdwg.mxu0
    %v1158 = vsel %vm413, %v976, 0
    %v1161 = vsel %vm413, %v977, 0
    %1163 = vmatprep.subr.mxu0 0.0
    %1164 = vmatpush1.msra.mxu0 %v1119
    %1165 = vmatprep.subr.mxu0 0.0
    %1166 = vmatpush1.msra.mxu0 %v1124
    %1167 = vmatprep.subr.mxu0 0.0
    %1168 = vmatpush1.msra.mxu0 %v1129
    %1169 = vmatprep.subr.mxu0 0.0
    %1170 = vmatpush1.msra.mxu0 %v1134
    %1171 = vmatprep.subr.mxu0 0.0
    %1172 = vmatpush1.msra.mxu0 %v1139
    %1173 = vmatprep.subr.mxu0 0.0
    %1174 = vmatpush1.msra.mxu0 %v1144
    %1175 = vmatprep.subr.mxu0 0.0
    %1176 = vmatpush1.msra.mxu0 %v1149
    %1177 = vmatprep.subr.mxu0 0.0
    %1178 = vmatpush1.msra.mxu0 %v1154
    %1179 = vmatprep.subr.mxu0 0.0
    %1180 = vmatpush1.msra.mxu0 0.0
    %1181 = vmatprep.subr.mxu0 0.0
    %1182 = vmatpush1.msra.mxu0 0.0
    %1183 = vmatprep.subr.mxu0 0.0
    %1184 = vmatpush1.msra.mxu0 0.0
    %1185 = vmatprep.subr.mxu0 0.0
    %1186 = vmatpush1.msra.mxu0 0.0
    %1187 = vmatprep.subr.mxu0 0.0
    %1188 = vmatpush1.msra.mxu0 0.0
    %1189 = vmatprep.subr.mxu0 0.0
    %1190 = vmatpush1.msra.mxu0 0.0
    %1191 = vmatprep.subr.mxu0 0.0
    %1192 = vmatpush1.msra.mxu0 0.0
    %1193 = vmatprep.subr.mxu0 0.0
    %1194 = vmatpush1.msra.mxu0 0.0
    %1195 = vmatprep.subr.mxu0 0.0
    %1196 = vmatpush1.msra.mxu0 0.0
    %1197 = vmatprep.subr.mxu0 0.0
    %1198 = vmatpush1.msra.mxu0 0.0
    %1199 = vmatprep.subr.mxu0 0.0
    %1200 = vmatpush1.msra.mxu0 0.0
    %1201 = vmatprep.subr.mxu0 0.0
    %1202 = vmatpush1.msra.mxu0 0.0
    %1203 = vmatprep.subr.mxu0 0.0
    %1204 = vmatpush1.msra.mxu0 0.0
    %1205 = vmatprep.subr.mxu0 0.0
    %1206 = vmatpush1.msra.mxu0 0.0
    %1207 = vmatprep.subr.mxu0 0.0
    %1208 = vmatpush1.msra.mxu0 0.0
    %1209 = vmatprep.subr.mxu0 0.0
    %1210 = vmatpush1.msra.mxu0 0.0
    %1211 = vmatprep.subr.mxu0 0.0
    %1212 = vmatpush1.msra.mxu0 0.0
    %1213 = vmatprep.subr.mxu0 0.0
    %1214 = vmatpush1.msra.mxu0 0.0
    %1215 = vmatprep.subr.mxu0 0.0
    %1216 = vmatpush1.msra.mxu0 0.0
    %1217 = vmatprep.subr.mxu0 0.0
    %1218 = vmatpush1.msra.mxu0 0.0
    %1219 = vmatprep.subr.mxu0 0.0
    %1220 = vmatpush1.msra.mxu0 0.0
    %1221 = vmatprep.subr.mxu0 0.0
    %1222 = vmatpush1.msra.mxu0 0.0
    %1223 = vmatprep.subr.mxu0 0.0
    %1224 = vmatpush1.msra.mxu0 0.0
    %1225 = vmatprep.subr.mxu0 0.0
    %1226 = vmatpush1.msra.mxu0 0.0
    %1227 = vmatprep.mubr.f32.mxu0 0.0
    %1228 = vmatmul.mubr.f32.gmra.mrb[0].mxu0 %v1158
    %v1229 = vpop.f32.mrb[0].mxu0
    %v1230 = vadd.f32 0.0, %v1229
    %v1231 = vpop.f32.mrb[0].mxu0
    %1232 = vmatprep.mubr.f32.mxu0 0.0
    %1233 = vmatmul.mubr.f32.gmra.mrb[0].mxu0 %v1161
    %v1234 = vpop.f32.mrb[0].mxu0
    %v1235 = vadd.f32 0.0, %v1234
    %v1236 = vpop.f32.mrb[0].mxu0
    %1237 = vdwg.mxu0
    %v1238 = vlaneseq
    %v1239 = vshrl.u32 %v1238, 7
    %v1240 = vsub.s32 1, %v1239
    %v1241 = vrot.slane %v866, %v1240
    %v1243 = vsel %vm125, %v1230, 0
    %v1246 = vsel %vm125, %v1235, 0
    %1248 = vmatprep.subr.mxu0 0.0
    %1249 = vmatpush1.msra.mxu0 %v847
    %1250 = vmatprep.subr.mxu0 0.0
    %1251 = vmatpush1.msra.mxu0 %v848
    %1252 = vmatprep.subr.mxu0 0.0
    %1253 = vmatpush1.msra.mxu0 %v849
    %1254 = vmatprep.subr.mxu0 0.0
    %1255 = vmatpush1.msra.mxu0 %v850
    %1256 = vmatprep.subr.mxu0 0.0
    %1257 = vmatpush1.msra.mxu0 0.0
    %1258 = vmatprep.subr.mxu0 0.0
    %1259 = vmatpush1.msra.mxu0 0.0
    %1260 = vmatprep.subr.mxu0 0.0
    %1261 = vmatpush1.msra.mxu0 0.0
    %1262 = vmatprep.subr.mxu0 0.0
    %1263 = vmatpush1.msra.mxu0 0.0
    %1264 = vmatprep.subr.mxu0 0.0
    %1265 = vmatpush1.msra.mxu0 0.0
    %1266 = vmatprep.subr.mxu0 0.0
    %1267 = vmatpush1.msra.mxu0 0.0
    %1268 = vmatprep.subr.mxu0 0.0
    %1269 = vmatpush1.msra.mxu0 0.0
    %1270 = vmatprep.subr.mxu0 0.0
    %1271 = vmatpush1.msra.mxu0 0.0
    %1272 = vmatprep.subr.mxu0 0.0
    %1273 = vmatpush1.msra.mxu0 0.0
    %1274 = vmatprep.subr.mxu0 0.0
    %1275 = vmatpush1.msra.mxu0 0.0
    %1276 = vmatprep.subr.mxu0 0.0
    %1277 = vmatpush1.msra.mxu0 0.0
    %1278 = vmatprep.subr.mxu0 0.0
    %1279 = vmatpush1.msra.mxu0 0.0
    %1280 = vmatprep.subr.mxu0 0.0
    %1281 = vmatpush1.msra.mxu0 0.0
    %1282 = vmatprep.subr.mxu0 0.0
    %1283 = vmatpush1.msra.mxu0 0.0
    %1284 = vmatprep.subr.mxu0 0.0
    %1285 = vmatpush1.msra.mxu0 0.0
    %1286 = vmatprep.subr.mxu0 0.0
    %1287 = vmatpush1.msra.mxu0 0.0
    %1288 = vmatprep.subr.mxu0 0.0
    %1289 = vmatpush1.msra.mxu0 0.0
    %1290 = vmatprep.subr.mxu0 0.0
    %1291 = vmatpush1.msra.mxu0 0.0
    %1292 = vmatprep.subr.mxu0 0.0
    %1293 = vmatpush1.msra.mxu0 0.0
    %1294 = vmatprep.subr.mxu0 0.0
    %1295 = vmatpush1.msra.mxu0 0.0
    %1296 = vmatprep.subr.mxu0 0.0
    %1297 = vmatpush1.msra.mxu0 0.0
    %1298 = vmatprep.subr.mxu0 0.0
    %1299 = vmatpush1.msra.mxu0 0.0
    %1300 = vmatprep.subr.mxu0 0.0
    %1301 = vmatpush1.msra.mxu0 0.0
    %1302 = vmatprep.subr.mxu0 0.0
    %1303 = vmatpush1.msra.mxu0 0.0
    %1304 = vmatprep.subr.mxu0 0.0
    %1305 = vmatpush1.msra.mxu0 0.0
    %1306 = vmatprep.subr.mxu0 0.0
    %1307 = vmatpush1.msra.mxu0 0.0
    %1308 = vmatprep.subr.mxu0 0.0
    %1309 = vmatpush1.msra.mxu0 0.0
    %1310 = vmatprep.subr.mxu0 0.0
    %1311 = vmatpush1.msra.mxu0 0.0
    %1312 = vmatprep.mubr.f32.mxu0 0.0
    %1313 = vmatmul.mubr.f32.gmra.mrb[0].mxu0 %v1243
    %v1314 = vpop.f32.mrb[0].mxu0
    %v1315 = vadd.f32 %v1241, %v1314
    %v1316 = vpop.f32.mrb[0].mxu0
    %1317 = vmatprep.mubr.f32.mxu0 0.0
    %1318 = vmatmul.mubr.f32.gmra.mrb[0].mxu0 %v1246
    %v1319 = vpop.f32.mrb[0].mxu0
    %v1320 = vadd.f32 %v1241, %v1319
    %v1321 = vpop.f32.mrb[0].mxu0
    %1322 = vdwg.mxu0
    %v1323 = vadd.f32 %v839, %v1315
    %v1324 = vadd.f32 %v840, %v1320
    %v1325 = vsel %vm125, %v1323, 0.0
    %1326 = vadd.xlane.f32.xlu0 %v1325
    %v1327 = vpop.xlane.xlu0 %1326
    %v1328 = vsel %vm125, %v1324, 0.0
    %1329 = vadd.xlane.f32.xlu0 %v1328
    %v1330 = vpop.xlane.xlu0 %1329
    %v1331 = vmul.f32 %v1327, %v588
    %v1332 = vmul.f32 %v1330, %v588
    %v1333 = vmul.f32 %v1323, %v1323
    %v1334 = vmul.f32 %v1324, %v1324
    %v1335 = vsel %vm125, %v1333, 0.0
    %1336 = vadd.xlane.f32.xlu0 %v1335
    %v1337 = vpop.xlane.xlu0 %1336
    %v1338 = vsel %vm125, %v1334, 0.0
    %1339 = vadd.xlane.f32.xlu0 %v1338
    %v1340 = vpop.xlane.xlu0 %1339
    %v1341 = vmul.f32 %v1337, %v588
    %v1342 = vmul.f32 %v1340, %v588
    %v1343 = vmul.f32 %v1331, %v1331
    %v1344 = vmul.f32 %v1332, %v1332
    %v1345 = vsub.f32 %v1341, %v1343
    %v1346 = vsub.f32 %v1342, %v1344
    %v1347 = vsub.f32 %v1323, %v1331
    %v1348 = vsub.f32 %v1324, %v1332
    %v1349 = vadd.f32 %v1345, 1e-05
    %v1350 = vadd.f32 %v1346, 1e-05
    %v1351 = vrsqrt.pop %v1349
    %v1352 = vrsqrt.pop %v1350
    %v1353 = vmul.f32 %v1347, %v1351
    %v1354 = vmul.f32 %v1348, %v1352
    %v1355 = vlaneseq
    %v1356 = vshrl.u32 %v1355, 7
    %v1357 = vsub.s32 4, %v1356
    %v1358 = vrot.slane %v866, %v1357
    %v1359 = vmul.f32 %v1353, %v1358
    %v1360 = vmul.f32 %v1354, %v1358
    %v1361 = vlaneseq
    %v1362 = vshrl.u32 %v1361, 7
    %v1363 = vsub.s32 5, %v1362
    %v1364 = vrot.slane %v866, %v1363
    %v1365 = vadd.f32 %v1359, %v1364
    %v1366 = vadd.f32 %v1360, %v1364
    %v1367 = vlaneseq
    %v1368 = vshrl.u32 %v1367, 7
    %v1369 = vsub.s32 2, %v1368
    %v1370 = vrot.slane %v866, %v1369
    %v1372 = vsel %vm125, %v1365, 0
    %v1375 = vsel %vm125, %v1366, 0
    %1377 = vmatprep.subr.mxu0 0.0
    %1378 = vmatpush1.msra.mxu0 %v852
    %1379 = vmatprep.subr.mxu0 0.0
    %1380 = vmatpush1.msra.mxu0 %v853
    %1381 = vmatprep.subr.mxu0 0.0
    %1382 = vmatpush1.msra.mxu0 %v854
    %1383 = vmatprep.subr.mxu0 0.0
    %1384 = vmatpush1.msra.mxu0 %v855
    %1385 = vmatprep.subr.mxu0 0.0
    %1386 = vmatpush1.msra.mxu0 0.0
    %1387 = vmatprep.subr.mxu0 0.0
    %1388 = vmatpush1.msra.mxu0 0.0
    %1389 = vmatprep.subr.mxu0 0.0
    %1390 = vmatpush1.msra.mxu0 0.0
    %1391 = vmatprep.subr.mxu0 0.0
    %1392 = vmatpush1.msra.mxu0 0.0
    %1393 = vmatprep.subr.mxu0 0.0
    %1394 = vmatpush1.msra.mxu0 0.0
    %1395 = vmatprep.subr.mxu0 0.0
    %1396 = vmatpush1.msra.mxu0 0.0
    %1397 = vmatprep.subr.mxu0 0.0
    %1398 = vmatpush1.msra.mxu0 0.0
    %1399 = vmatprep.subr.mxu0 0.0
    %1400 = vmatpush1.msra.mxu0 0.0
    %1401 = vmatprep.subr.mxu0 0.0
    %1402 = vmatpush1.msra.mxu0 0.0
    %1403 = vmatprep.subr.mxu0 0.0
    %1404 = vmatpush1.msra.mxu0 0.0
    %1405 = vmatprep.subr.mxu0 0.0
    %1406 = vmatpush1.msra.mxu0 0.0
    %1407 = vmatprep.subr.mxu0 0.0
    %1408 = vmatpush1.msra.mxu0 0.0
    %1409 = vmatprep.subr.mxu0 0.0
    %1410 = vmatpush1.msra.mxu0 0.0
    %1411 = vmatprep.subr.mxu0 0.0
    %1412 = vmatpush1.msra.mxu0 0.0
    %1413 = vmatprep.subr.mxu0 0.0
    %1414 = vmatpush1.msra.mxu0 0.0
    %1415 = vmatprep.subr.mxu0 0.0
    %1416 = vmatpush1.msra.mxu0 0.0
    %1417 = vmatprep.subr.mxu0 0.0
    %1418 = vmatpush1.msra.mxu0 0.0
    %1419 = vmatprep.subr.mxu0 0.0
    %1420 = vmatpush1.msra.mxu0 0.0
    %1421 = vmatprep.subr.mxu0 0.0
    %1422 = vmatpush1.msra.mxu0 0.0
    %1423 = vmatprep.subr.mxu0 0.0
    %1424 = vmatpush1.msra.mxu0 0.0
    %1425 = vmatprep.subr.mxu0 0.0
    %1426 = vmatpush1.msra.mxu0 0.0
    %1427 = vmatprep.subr.mxu0 0.0
    %1428 = vmatpush1.msra.mxu0 0.0
    %1429 = vmatprep.subr.mxu0 0.0
    %1430 = vmatpush1.msra.mxu0 0.0
    %1431 = vmatprep.subr.mxu0 0.0
    %1432 = vmatpush1.msra.mxu0 0.0
    %1433 = vmatprep.subr.mxu0 0.0
    %1434 = vmatpush1.msra.mxu0 0.0
    %1435 = vmatprep.subr.mxu0 0.0
    %1436 = vmatpush1.msra.mxu0 0.0
    %1437 = vmatprep.subr.mxu0 0.0
    %1438 = vmatpush1.msra.mxu0 0.0
    %1439 = vmatprep.subr.mxu0 0.0
    %1440 = vmatpush1.msra.mxu0 0.0
    %1441 = vmatprep.mubr.f32.mxu0 0.0
    %1442 = vmatmul.mubr.f32.gmra.mrb[0].mxu0 %v1372
    %v1443 = vpop.f32.mrb[0].mxu0
    %v1444 = vadd.f32 %v1370, %v1443
    %v1445 = vpop.f32.mrb[0].mxu0
    %1446 = vmatprep.mubr.f32.mxu0 0.0
    %1447 = vmatmul.mubr.f32.gmra.mrb[0].mxu0 %v1375
    %v1448 = vpop.f32.mrb[0].mxu0
    %v1449 = vadd.f32 %v1370, %v1448
    %v1450 = vpop.f32.mrb[0].mxu0
    %1451 = vdwg.mxu0
    %v1452 = vmax.f32 %v1444, 0.0
    %v1453 = vmax.f32 %v1449, 0.0
    %v1454 = vlaneseq
    %v1455 = vshrl.u32 %v1454, 7
    %v1456 = vsub.s32 3, %v1455
    %v1457 = vrot.slane %v866, %v1456
    %v1459 = vsel %vm413, %v1452, 0
    %v1462 = vsel %vm413, %v1453, 0
    %1464 = vmatprep.subr.mxu0 0.0
    %1465 = vmatpush1.msra.mxu0 %v857
    %1466 = vmatprep.subr.mxu0 0.0
    %1467 = vmatpush1.msra.mxu0 %v858
    %1468 = vmatprep.subr.mxu0 0.0
    %1469 = vmatpush1.msra.mxu0 %v859
    %1470 = vmatprep.subr.mxu0 0.0
    %1471 = vmatpush1.msra.mxu0 %v860
    %1472 = vmatprep.subr.mxu0 0.0
    %1473 = vmatpush1.msra.mxu0 %v861
    %1474 = vmatprep.subr.mxu0 0.0
    %1475 = vmatpush1.msra.mxu0 %v862
    %1476 = vmatprep.subr.mxu0 0.0
    %1477 = vmatpush1.msra.mxu0 %v863
    %1478 = vmatprep.subr.mxu0 0.0
    %1479 = vmatpush1.msra.mxu0 %v864
    %1480 = vmatprep.subr.mxu0 0.0
    %1481 = vmatpush1.msra.mxu0 0.0
    %1482 = vmatprep.subr.mxu0 0.0
    %1483 = vmatpush1.msra.mxu0 0.0
    %1484 = vmatprep.subr.mxu0 0.0
    %1485 = vmatpush1.msra.mxu0 0.0
    %1486 = vmatprep.subr.mxu0 0.0
    %1487 = vmatpush1.msra.mxu0 0.0
    %1488 = vmatprep.subr.mxu0 0.0
    %1489 = vmatpush1.msra.mxu0 0.0
    %1490 = vmatprep.subr.mxu0 0.0
    %1491 = vmatpush1.msra.mxu0 0.0
    %1492 = vmatprep.subr.mxu0 0.0
    %1493 = vmatpush1.msra.mxu0 0.0
    %1494 = vmatprep.subr.mxu0 0.0
    %1495 = vmatpush1.msra.mxu0 0.0
    %1496 = vmatprep.subr.mxu0 0.0
    %1497 = vmatpush1.msra.mxu0 0.0
    %1498 = vmatprep.subr.mxu0 0.0
    %1499 = vmatpush1.msra.mxu0 0.0
    %1500 = vmatprep.subr.mxu0 0.0
    %1501 = vmatpush1.msra.mxu0 0.0
    %1502 = vmatprep.subr.mxu0 0.0
    %1503 = vmatpush1.msra.mxu0 0.0
    %1504 = vmatprep.subr.mxu0 0.0
    %1505 = vmatpush1.msra.mxu0 0.0
    %1506 = vmatprep.subr.mxu0 0.0
    %1507 = vmatpush1.msra.mxu0 0.0
    %1508 = vmatprep.subr.mxu0 0.0
    %1509 = vmatpush1.msra.mxu0 0.0
    %1510 = vmatprep.subr.mxu0 0.0
    %1511 = vmatpush1.msra.mxu0 0.0
    %1512 = vmatprep.subr.mxu0 0.0
    %1513 = vmatpush1.msra.mxu0 0.0
    %1514 = vmatprep.subr.mxu0 0.0
    %1515 = vmatpush1.msra.mxu0 0.0
    %1516 = vmatprep.subr.mxu0 0.0
    %1517 = vmatpush1.msra.mxu0 0.0
    %1518 = vmatprep.subr.mxu0 0.0
    %1519 = vmatpush1.msra.mxu0 0.0
    %1520 = vmatprep.subr.mxu0 0.0
    %1521 = vmatpush1.msra.mxu0 0.0
    %1522 = vmatprep.subr.mxu0 0.0
    %1523 = vmatpush1.msra.mxu0 0.0
    %1524 = vmatprep.subr.mxu0 0.0
    %1525 = vmatpush1.msra.mxu0 0.0
    %1526 = vmatprep.subr.mxu0 0.0
    %1527 = vmatpush1.msra.mxu0 0.0
    %1528 = vmatprep.mubr.f32.mxu0 0.0
    %1529 = vmatmul.mubr.f32.gmra.mrb[0].mxu0 %v1459
    %v1530 = vpop.f32.mrb[0].mxu0
    %v1531 = vadd.f32 %v1457, %v1530
    %v1532 = vpop.f32.mrb[0].mxu0
    %1533 = vmatprep.mubr.f32.mxu0 0.0
    %1534 = vmatmul.mubr.f32.gmra.mrb[0].mxu0 %v1462
    %v1535 = vpop.f32.mrb[0].mxu0
    %v1536 = vadd.f32 %v1457, %v1535
    %v1537 = vpop.f32.mrb[0].mxu0
    %1538 = vdwg.mxu0
    %v1539 = vadd.f32 %v1365, %v1531
    %v1540 = vadd.f32 %v1366, %v1536
    %v1541 = vsel %vm125, %v1539, 0.0
    %1542 = vadd.xlane.f32.xlu0 %v1541
    %v1543 = vpop.xlane.xlu0 %1542
    %v1544 = vsel %vm125, %v1540, 0.0
    %1545 = vadd.xlane.f32.xlu0 %v1544
    %v1546 = vpop.xlane.xlu0 %1545
    %v1547 = vmul.f32 %v1543, %v588
    %v1548 = vmul.f32 %v1546, %v588
    %v1549 = vmul.f32 %v1539, %v1539
    %v1550 = vmul.f32 %v1540, %v1540
    %v1551 = vsel %vm125, %v1549, 0.0
    %1552 = vadd.xlane.f32.xlu0 %v1551
    %v1553 = vpop.xlane.xlu0 %1552
    %v1554 = vsel %vm125, %v1550, 0.0
    %1555 = vadd.xlane.f32.xlu0 %v1554
    %v1556 = vpop.xlane.xlu0 %1555
    %v1557 = vmul.f32 %v1553, %v588
    %v1558 = vmul.f32 %v1556, %v588
    %v1559 = vmul.f32 %v1547, %v1547
    %v1560 = vmul.f32 %v1548, %v1548
    %v1561 = vsub.f32 %v1557, %v1559
    %v1562 = vsub.f32 %v1558, %v1560
    %v1563 = vsub.f32 %v1539, %v1547
    %v1564 = vsub.f32 %v1540, %v1548
    %v1565 = vadd.f32 %v1561, 1e-05
    %v1566 = vadd.f32 %v1562, 1e-05
    %v1567 = vrsqrt.pop %v1565
    %v1568 = vrsqrt.pop %v1566
    %v1569 = vmul.f32 %v1563, %v1567
    %v1570 = vmul.f32 %v1564, %v1568
    %v1571 = vlaneseq
    %v1572 = vshrl.u32 %v1571, 7
    %v1573 = vsub.s32 6, %v1572
    %v1574 = vrot.slane %v866, %v1573
    %v1575 = vmul.f32 %v1569, %v1574
    %v1576 = vmul.f32 %v1570, %v1574
    %v1577 = vlaneseq
    %v1578 = vshrl.u32 %v1577, 7
    %v1579 = vsub.s32 7, %v1578
    %v1580 = vrot.slane %v866, %v1579
    %v1581 = vadd.f32 %v1575, %v1580
    %v1582 = vadd.f32 %v1576, %v1580
    %1583 = vst.msk [vmem:[#allocation7] sm:$0xff] %vm125, %v1581
    %1584 = vst.msk [vmem:[#allocation7 + $0x8] sm:$0xff] %vm125, %v1582
    // Predicated region
    $region38: #{transformer_encoder_forward.1} parent=1 // pred_check
      _
    $region39: #{transformer_encoder_forward.1} parent=1 // pred_check_branch
      %1586 = sbr.rel (0) target = $region41
    $region40: #{transformer_encoder_forward.1} parent=1 // pred_region
      %s1588 = ssub.s32 256, 256
      %1589 = vsyncadd [#allocation4], %s1588
      %s1590 = sshll.u32 [#allocation7], 4
      %s1591 = int_to_ptr.vmem [resolvable:$true] %s1590
      %1596 = dma.vmem_to_hbm [thread:$0]  %s1591, 256, %s7, [#allocation4], 128, 128, 8
    $region41: #{transformer_encoder_forward.1} parent=1 // pred_fallthru
      _
    // Predicated region
    $region42: #{transformer_encoder_forward.1} parent=1 // pred_check
      _
    $region43: #{transformer_encoder_forward.1} parent=1 // pred_check_branch
      %1598 = sbr.rel (0) target = $region45
    $region44: #{transformer_encoder_forward.1} parent=1 // pred_region
      %1599 = dma.done [#allocation4], 256
    $region45: #{transformer_encoder_forward.1} parent=1 // pred_fallthru
      _
    %1600 = vsyncpa [#allocation3], 1
    %1601 = vsyncpa [#allocation6], 1
    %1602 = vsyncpa [#allocation4], 1

</llo_original>
